<compile_context>
chip_gen: v7x
topology: tpu7x:2x2x1
jax: 0.10.0
libtpu: 0.0.40
codegen_flags: <defaults>
</compile_context>

<pallas_src>
import jax
import jax.numpy as jnp
from jax import lax
from jax.experimental import pallas as pl
from jax.experimental.pallas import tpu as pltpu

LN_EPS = 1e-5
PADDED_CLASSES = 128  # lane-dense output width


def _layer_norm(h, gamma, beta):
    mu = jnp.mean(h, axis=-1, keepdims=True)
    var = jnp.mean((h - mu) ** 2, axis=-1, keepdims=True)  # biased var, like PyTorch LN
    return (h - mu) * lax.rsqrt(var + LN_EPS) * gamma + beta


def transformer_kernel(
    x_ref,
    wqkv_ref, bqkv_ref,
    wo_ref, bo_ref,
    ln1g_ref, ln1b_ref,
    w1_ref, b1_ref, w2t_ref, b2_ref,
    ln2g_ref, ln2b_ref,
    wfc_ref, bfc_ref,
    out_ref,
):
    x = x_ref[...].astype(jnp.float32)                        # (S, D)
    d_model = x.shape[-1]

    # ---- single-head self-attention (nhead=1), fused QKV projection ----
    qkv = jnp.dot(x, wqkv_ref[...], preferred_element_type=jnp.float32) + bqkv_ref[...]
    q = qkv[:, :d_model]
    k = qkv[:, d_model:2 * d_model]
    v = qkv[:, 2 * d_model:]

    scale = 1.0 / jnp.sqrt(jnp.float32(d_model))              # head_dim == d_model
    # contract last dims of q and k directly (no explicit transpose/relayout of k)
    s = lax.dot_general(q, k, (((1,), (1,)), ((), ())),
                        preferred_element_type=jnp.float32) * scale    # (S, S)
    s = s - jnp.max(s, axis=-1, keepdims=True)
    p = jnp.exp(s)
    p = p * pl.reciprocal(jnp.sum(p, axis=-1, keepdims=True), approx=True)
    attn = jnp.dot(p, v, preferred_element_type=jnp.float32)           # (S, D)
    attn = jnp.dot(attn, wo_ref[...], preferred_element_type=jnp.float32) + bo_ref[...]

    # ---- residual + LayerNorm1 (post-norm) ----
    h = _layer_norm(x + attn, ln1g_ref[...], ln1b_ref[...])

    # ---- feed-forward (Linear -> ReLU -> Linear), bf16 MXU operands, f32 accum ----
    f = jnp.dot(h.astype(jnp.bfloat16), w1_ref[...],
                preferred_element_type=jnp.float32) + b1_ref[...]
    f = jnp.maximum(f, 0.0)
    # w2t is the PyTorch (d_model, d_ff) weight; contracting the d_ff axis of both
    # operands computes f @ W2^T with a lane-dense (d_ff on lanes) RHS.
    f2 = lax.dot_general(f.astype(jnp.bfloat16), w2t_ref[...],
                         (((1,), (1,)), ((), ())),
                         preferred_element_type=jnp.float32) + b2_ref[...]

    # ---- residual + LayerNorm2 ----
    h2 = _layer_norm(h + f2, ln2g_ref[...], ln2b_ref[...])

    # ---- final classifier Linear (padded to 128 lanes -> unmasked stores) ----
    out = jnp.dot(h2, wfc_ref[...], preferred_element_type=jnp.float32) + bfc_ref[...]
    out_ref[...] = out.astype(out_ref.dtype)


def transformer_forward(x, params, num_classes):
    """x: (S, D) float32 -> (S, num_classes) float32."""
    order = [
        "wqkv", "bqkv",
        "wo", "bo",
        "ln1g", "ln1b",
        "w1", "b1", "w2t", "b2",
        "ln2g", "ln2b",
        "wfc", "bfc",
    ]
    args = [x] + [params[k] for k in order]
    S = x.shape[0]
    c_pad = params["wfc"].shape[1]
    vmem = pl.BlockSpec(memory_space=pltpu.MemorySpace.VMEM)
    out = pl.pallas_call(
        transformer_kernel,
        out_shape=jax.ShapeDtypeStruct((S, c_pad), jnp.float32),
        in_specs=[vmem] * len(args),
        out_specs=vmem,
    )(*args)
    return out[:, :num_classes]


def init_params(key, d_model, d_ff, num_classes):
    """Parameter init matching the PyTorch module's shapes.

    PyTorch Linear stores W as (out, in) and computes x @ W^T + b; projections are
    stored transposed (in, out) so the kernel computes x @ W.  linear2 is kept in
    its native (d_model, d_ff) layout (contracted on the d_ff axis in-kernel).
    """
    ks = jax.random.split(key, 8)

    def lin(k, fan_in, fan_out, shape=None):
        bound = 1.0 / jnp.sqrt(jnp.float32(fan_in))
        kw, kb = jax.random.split(k)
        w = jax.random.uniform(kw, shape or (fan_in, fan_out), jnp.float32, -bound, bound)
        b = jax.random.uniform(kb, (1, fan_out), jnp.float32, -bound, bound)
        return w, b

    wq, bq = lin(ks[0], d_model, d_model)        # slices of in_proj_weight / bias
    wk, bk = lin(ks[1], d_model, d_model)
    wv, bv = lin(ks[2], d_model, d_model)
    wqkv = jnp.concatenate([wq, wk, wv], axis=1)          # (D, 3D) fused QKV weight
    bqkv = jnp.concatenate([bq, bk, bv], axis=1)          # (1, 3D)

    wo, bo = lin(ks[3], d_model, d_model)                 # self_attn.out_proj
    w1, b1 = lin(ks[4], d_model, d_ff)                    # encoder_layer.linear1
    w2t, b2 = lin(ks[5], d_ff, d_model, shape=(d_model, d_ff))  # linear2, (out, in) layout
    wfc, bfc = lin(ks[6], d_model, num_classes)           # self.fc

    # pad classifier to a lane-dense 128-wide output (extra columns are zero)
    wfc_pad = jnp.zeros((d_model, PADDED_CLASSES), jnp.float32).at[:, :num_classes].set(wfc)
    bfc_pad = jnp.zeros((1, PADDED_CLASSES), jnp.float32).at[:, :num_classes].set(bfc)

    ones = jnp.ones((1, d_model), jnp.float32)
    zeros = jnp.zeros((1, d_model), jnp.float32)
    return {
        "wqkv": wqkv, "bqkv": bqkv,
        "wo": wo, "bo": bo,
        "ln1g": ones, "ln1b": zeros,                       # norm1.weight / norm1.bias
        "w1": w1.astype(jnp.bfloat16), "b1": b1,           # FFN weights kept in bf16
        "w2t": w2t.astype(jnp.bfloat16), "b2": b2,
        "ln2g": ones, "ln2b": zeros,                       # norm2.weight / norm2.bias
        "wfc": wfc_pad, "bfc": bfc_pad,
    }


def reference_forward(x, p, num_classes):
    """Pure-JAX (f32) reference mirroring PyTorch TransformerEncoderLayer (eval mode)."""
    d = x.shape[-1]
    qkv = x @ p["wqkv"] + p["bqkv"]
    q, k, v = qkv[:, :d], qkv[:, d:2 * d], qkv[:, 2 * d:]
    s = (q @ k.T) / jnp.sqrt(jnp.float32(d))
    a = jax.nn.softmax(s, axis=-1) @ v
    a = a @ p["wo"] + p["bo"]

    def ln(h, g, b):
        mu = jnp.mean(h, -1, keepdims=True)
        var = jnp.mean((h - mu) ** 2, -1, keepdims=True)
        return (h - mu) / jnp.sqrt(var + LN_EPS) * g + b

    h = ln(x + a, p["ln1g"], p["ln1b"])
    w1 = p["w1"].astype(jnp.float32)
    w2t = p["w2t"].astype(jnp.float32)
    f = jnp.maximum(h @ w1 + p["b1"], 0.0) @ w2t.T + p["b2"]
    h2 = ln(h + f, p["ln2g"], p["ln2b"])
    return h2 @ p["wfc"][:, :num_classes] + p["bfc"][:, :num_classes]


if __name__ == "__main__":
    SEQ = 8          # sequence length (PyTorch batch dim of size 1 is squeezed away)
    D_MODEL = 32     # input_size / d_model
    D_FF = 2048      # nn.TransformerEncoderLayer default dim_feedforward
    NUM_CLASSES = 10

    key = jax.random.PRNGKey(0)
    kx, kp = jax.random.split(key)
    x = jax.random.normal(kx, (SEQ, D_MODEL), jnp.float32)
    params = init_params(kp, D_MODEL, D_FF, NUM_CLASSES)

    out = transformer_forward(x, params, NUM_CLASSES)
    out = jax.block_until_ready(out)

    ref = reference_forward(x, params, NUM_CLASSES)
    assert out.shape == (SEQ, NUM_CLASSES)
    # bf16 FFN matmuls + approx-reciprocal softmax vs f32 reference -> ~1e-3 abs error
    assert jnp.allclose(out, ref, rtol=1e-2, atol=1e-2), "mismatch vs reference"

    print("KERNEL_OK")
</pallas_src>

<mosaic_0001>
module attributes {stable_mosaic.version = 11 : i64} {
  func.func @transformer_kernel(%arg0: memref<8x32xf32, #tpu.memory_space<vmem>>, %arg1: memref<32x96xf32, #tpu.memory_space<vmem>>, %arg2: memref<1x96xf32, #tpu.memory_space<vmem>>, %arg3: memref<32x32xf32, #tpu.memory_space<vmem>>, %arg4: memref<1x32xf32, #tpu.memory_space<vmem>>, %arg5: memref<1x32xf32, #tpu.memory_space<vmem>>, %arg6: memref<1x32xf32, #tpu.memory_space<vmem>>, %arg7: memref<32x2048xbf16, #tpu.memory_space<vmem>>, %arg8: memref<1x2048xf32, #tpu.memory_space<vmem>>, %arg9: memref<32x2048xbf16, #tpu.memory_space<vmem>>, %arg10: memref<1x32xf32, #tpu.memory_space<vmem>>, %arg11: memref<1x32xf32, #tpu.memory_space<vmem>>, %arg12: memref<1x32xf32, #tpu.memory_space<vmem>>, %arg13: memref<32x128xf32, #tpu.memory_space<vmem>>, %arg14: memref<1x128xf32, #tpu.memory_space<vmem>>, %arg15: memref<8x128xf32, #tpu.memory_space<vmem>>) attributes {dimension_semantics = [], scalar_prefetch = 0 : i64, scratch_operands = 0 : i64, tpu.core_type = #tpu.core_type<tc>} {
    %c0 = arith.constant 0 : index
    %c0_0 = arith.constant 0 : index
    %0 = vector.load %arg0[%c0, %c0_0] : memref<8x32xf32, #tpu.memory_space<vmem>>, vector<8x32xf32>
    %c0_1 = arith.constant 0 : index
    %c0_2 = arith.constant 0 : index
    %1 = vector.load %arg1[%c0_1, %c0_2] : memref<32x96xf32, #tpu.memory_space<vmem>>, vector<32x96xf32>
    %cst = arith.constant dense<0.000000e+00> : vector<8x96xf32>
    %2 = tpu.matmul %0, %1, %cst {dimension_numbers = #tpu.dot_dimension_numbers<[1], [0], [0], [1], [0, 0, 1, 1], [], []>} : vector<8x32xf32>, vector<32x96xf32>, vector<8x96xf32> -> vector<8x96xf32>
    %c0_3 = arith.constant 0 : index
    %c0_4 = arith.constant 0 : index
    %3 = vector.load %arg2[%c0_3, %c0_4] : memref<1x96xf32, #tpu.memory_space<vmem>>, vector<1x96xf32>
    %4 = vector.broadcast %3 : vector<1x96xf32> to vector<8x96xf32>
    %5 = arith.addf %2, %4 : vector<8x96xf32>
    %6 = vector.extract_strided_slice %5 {offsets = [0, 0], sizes = [8, 32], strides = [1, 1]} : vector<8x96xf32> to vector<8x32xf32>
    %7 = vector.extract_strided_slice %5 {offsets = [0, 32], sizes = [8, 32], strides = [1, 1]} : vector<8x96xf32> to vector<8x32xf32>
    %8 = vector.extract_strided_slice %5 {offsets = [0, 64], sizes = [8, 32], strides = [1, 1]} : vector<8x96xf32> to vector<8x32xf32>
    %cst_5 = arith.constant 3.200000e+01 : f32
    %9 = math.sqrt %cst_5 : f32
    %cst_6 = arith.constant 1.000000e+00 : f32
    %10 = arith.divf %cst_6, %9 : f32
    %cst_7 = arith.constant dense<0.000000e+00> : vector<8x8xf32>
    %11 = tpu.matmul %6, %7, %cst_7 {dimension_numbers = #tpu.dot_dimension_numbers<[1], [1], [0], [0], [0, 0, 1, 0], [], []>} : vector<8x32xf32>, vector<8x32xf32>, vector<8x8xf32> -> vector<8x8xf32>
    %12 = vector.broadcast %10 : f32 to vector<8x8xf32>
    %13 = arith.mulf %11, %12 : vector<8x8xf32>
    %cst_8 = arith.constant dense<0xFF800000> : vector<8xf32>
    %14 = vector.multi_reduction <maximumf>, %13, %cst_8 [1] : vector<8x8xf32> to vector<8xf32>
    %15 = vector.shape_cast %14 : vector<8xf32> to vector<8x1xf32>
    %16 = vector.broadcast %15 : vector<8x1xf32> to vector<8x8xf32>
    %17 = arith.subf %13, %16 : vector<8x8xf32>
    %18 = math.exp %17 : vector<8x8xf32>
    %cst_9 = arith.constant dense<0.000000e+00> : vector<8xf32>
    %19 = vector.multi_reduction <add>, %18, %cst_9 [1] : vector<8x8xf32> to vector<8xf32>
    %20 = vector.shape_cast %19 : vector<8xf32> to vector<8x1xf32>
    %21 = tpu.reciprocal %20 {approx = true} : vector<8x1xf32> -> vector<8x1xf32>
    %22 = vector.broadcast %21 : vector<8x1xf32> to vector<8x8xf32>
    %23 = arith.mulf %18, %22 : vector<8x8xf32>
    %cst_10 = arith.constant dense<0.000000e+00> : vector<8x32xf32>
    %24 = tpu.matmul %23, %8, %cst_10 {dimension_numbers = #tpu.dot_dimension_numbers<[1], [0], [0], [1], [0, 0, 1, 1], [], []>} : vector<8x8xf32>, vector<8x32xf32>, vector<8x32xf32> -> vector<8x32xf32>
    %c0_11 = arith.constant 0 : index
    %c0_12 = arith.constant 0 : index
    %25 = vector.load %arg3[%c0_11, %c0_12] : memref<32x32xf32, #tpu.memory_space<vmem>>, vector<32x32xf32>
    %cst_13 = arith.constant dense<0.000000e+00> : vector<8x32xf32>
    %26 = tpu.matmul %24, %25, %cst_13 {dimension_numbers = #tpu.dot_dimension_numbers<[1], [0], [0], [1], [0, 0, 1, 1], [], []>} : vector<8x32xf32>, vector<32x32xf32>, vector<8x32xf32> -> vector<8x32xf32>
    %c0_14 = arith.constant 0 : index
    %c0_15 = arith.constant 0 : index
    %27 = vector.load %arg4[%c0_14, %c0_15] : memref<1x32xf32, #tpu.memory_space<vmem>>, vector<1x32xf32>
    %28 = vector.broadcast %27 : vector<1x32xf32> to vector<8x32xf32>
    %29 = arith.addf %26, %28 : vector<8x32xf32>
    %30 = arith.addf %0, %29 : vector<8x32xf32>
    %c0_16 = arith.constant 0 : index
    %c0_17 = arith.constant 0 : index
    %31 = vector.load %arg5[%c0_16, %c0_17] : memref<1x32xf32, #tpu.memory_space<vmem>>, vector<1x32xf32>
    %c0_18 = arith.constant 0 : index
    %c0_19 = arith.constant 0 : index
    %32 = vector.load %arg6[%c0_18, %c0_19] : memref<1x32xf32, #tpu.memory_space<vmem>>, vector<1x32xf32>
    %cst_20 = arith.constant dense<0.000000e+00> : vector<8xf32>
    %33 = vector.multi_reduction <add>, %30, %cst_20 [1] : vector<8x32xf32> to vector<8xf32>
    %34 = vector.shape_cast %33 : vector<8xf32> to vector<8x1xf32>
    %cst_21 = arith.constant 3.200000e+01 : f32
    %35 = vector.broadcast %cst_21 : f32 to vector<8x1xf32>
    %36 = arith.divf %34, %35 : vector<8x1xf32>
    %37 = vector.broadcast %36 : vector<8x1xf32> to vector<8x32xf32>
    %38 = arith.subf %30, %37 : vector<8x32xf32>
    %39 = arith.mulf %38, %38 : vector<8x32xf32>
    %cst_22 = arith.constant dense<0.000000e+00> : vector<8xf32>
    %40 = vector.multi_reduction <add>, %39, %cst_22 [1] : vector<8x32xf32> to vector<8xf32>
    %41 = vector.shape_cast %40 : vector<8xf32> to vector<8x1xf32>
    %cst_23 = arith.constant 3.200000e+01 : f32
    %42 = vector.broadcast %cst_23 : f32 to vector<8x1xf32>
    %43 = arith.divf %41, %42 : vector<8x1xf32>
    %44 = vector.broadcast %36 : vector<8x1xf32> to vector<8x32xf32>
    %45 = arith.subf %30, %44 : vector<8x32xf32>
    %cst_24 = arith.constant 9.99999974E-6 : f32
    %46 = vector.broadcast %cst_24 : f32 to vector<8x1xf32>
    %47 = arith.addf %43, %46 : vector<8x1xf32>
    %48 = math.rsqrt %47 : vector<8x1xf32>
    %49 = vector.broadcast %48 : vector<8x1xf32> to vector<8x32xf32>
    %50 = arith.mulf %45, %49 : vector<8x32xf32>
    %51 = vector.broadcast %31 : vector<1x32xf32> to vector<8x32xf32>
    %52 = arith.mulf %50, %51 : vector<8x32xf32>
    %53 = vector.broadcast %32 : vector<1x32xf32> to vector<8x32xf32>
    %54 = arith.addf %52, %53 : vector<8x32xf32>
    %55 = arith.truncf %54 : vector<8x32xf32> to vector<8x32xbf16>
    %c0_25 = arith.constant 0 : index
    %c0_26 = arith.constant 0 : index
    %56 = vector.load %arg7[%c0_25, %c0_26] : memref<32x2048xbf16, #tpu.memory_space<vmem>>, vector<32x2048xbf16>
    %cst_27 = arith.constant dense<0.000000e+00> : vector<8x2048xf32>
    %57 = tpu.matmul %55, %56, %cst_27 {dimension_numbers = #tpu.dot_dimension_numbers<[1], [0], [0], [1], [0, 0, 1, 1], [], []>} : vector<8x32xbf16>, vector<32x2048xbf16>, vector<8x2048xf32> -> vector<8x2048xf32>
    %c0_28 = arith.constant 0 : index
    %c0_29 = arith.constant 0 : index
    %58 = vector.load %arg8[%c0_28, %c0_29] : memref<1x2048xf32, #tpu.memory_space<vmem>>, vector<1x2048xf32>
    %59 = vector.broadcast %58 : vector<1x2048xf32> to vector<8x2048xf32>
    %60 = arith.addf %57, %59 : vector<8x2048xf32>
    %cst_30 = arith.constant 0.000000e+00 : f32
    %61 = vector.broadcast %cst_30 : f32 to vector<8x2048xf32>
    %62 = arith.maximumf %60, %61 : vector<8x2048xf32>
    %63 = arith.truncf %62 : vector<8x2048xf32> to vector<8x2048xbf16>
    %c0_31 = arith.constant 0 : index
    %c0_32 = arith.constant 0 : index
    %64 = vector.load %arg9[%c0_31, %c0_32] : memref<32x2048xbf16, #tpu.memory_space<vmem>>, vector<32x2048xbf16>
    %cst_33 = arith.constant dense<0.000000e+00> : vector<8x32xf32>
    %65 = tpu.matmul %63, %64, %cst_33 {dimension_numbers = #tpu.dot_dimension_numbers<[1], [1], [0], [0], [0, 0, 1, 0], [], []>} : vector<8x2048xbf16>, vector<32x2048xbf16>, vector<8x32xf32> -> vector<8x32xf32>
    %c0_34 = arith.constant 0 : index
    %c0_35 = arith.constant 0 : index
    %66 = vector.load %arg10[%c0_34, %c0_35] : memref<1x32xf32, #tpu.memory_space<vmem>>, vector<1x32xf32>
    %67 = vector.broadcast %66 : vector<1x32xf32> to vector<8x32xf32>
    %68 = arith.addf %65, %67 : vector<8x32xf32>
    %69 = arith.addf %54, %68 : vector<8x32xf32>
    %c0_36 = arith.constant 0 : index
    %c0_37 = arith.constant 0 : index
    %70 = vector.load %arg11[%c0_36, %c0_37] : memref<1x32xf32, #tpu.memory_space<vmem>>, vector<1x32xf32>
    %c0_38 = arith.constant 0 : index
    %c0_39 = arith.constant 0 : index
    %71 = vector.load %arg12[%c0_38, %c0_39] : memref<1x32xf32, #tpu.memory_space<vmem>>, vector<1x32xf32>
    %cst_40 = arith.constant dense<0.000000e+00> : vector<8xf32>
    %72 = vector.multi_reduction <add>, %69, %cst_40 [1] : vector<8x32xf32> to vector<8xf32>
    %73 = vector.shape_cast %72 : vector<8xf32> to vector<8x1xf32>
    %cst_41 = arith.constant 3.200000e+01 : f32
    %74 = vector.broadcast %cst_41 : f32 to vector<8x1xf32>
    %75 = arith.divf %73, %74 : vector<8x1xf32>
    %76 = vector.broadcast %75 : vector<8x1xf32> to vector<8x32xf32>
    %77 = arith.subf %69, %76 : vector<8x32xf32>
    %78 = arith.mulf %77, %77 : vector<8x32xf32>
    %cst_42 = arith.constant dense<0.000000e+00> : vector<8xf32>
    %79 = vector.multi_reduction <add>, %78, %cst_42 [1] : vector<8x32xf32> to vector<8xf32>
    %80 = vector.shape_cast %79 : vector<8xf32> to vector<8x1xf32>
    %cst_43 = arith.constant 3.200000e+01 : f32
    %81 = vector.broadcast %cst_43 : f32 to vector<8x1xf32>
    %82 = arith.divf %80, %81 : vector<8x1xf32>
    %83 = vector.broadcast %75 : vector<8x1xf32> to vector<8x32xf32>
    %84 = arith.subf %69, %83 : vector<8x32xf32>
    %cst_44 = arith.constant 9.99999974E-6 : f32
    %85 = vector.broadcast %cst_44 : f32 to vector<8x1xf32>
    %86 = arith.addf %82, %85 : vector<8x1xf32>
    %87 = math.rsqrt %86 : vector<8x1xf32>
    %88 = vector.broadcast %87 : vector<8x1xf32> to vector<8x32xf32>
    %89 = arith.mulf %84, %88 : vector<8x32xf32>
    %90 = vector.broadcast %70 : vector<1x32xf32> to vector<8x32xf32>
    %91 = arith.mulf %89, %90 : vector<8x32xf32>
    %92 = vector.broadcast %71 : vector<1x32xf32> to vector<8x32xf32>
    %93 = arith.addf %91, %92 : vector<8x32xf32>
    %c0_45 = arith.constant 0 : index
    %c0_46 = arith.constant 0 : index
    %94 = vector.load %arg13[%c0_45, %c0_46] : memref<32x128xf32, #tpu.memory_space<vmem>>, vector<32x128xf32>
    %cst_47 = arith.constant dense<0.000000e+00> : vector<8x128xf32>
    %95 = tpu.matmul %93, %94, %cst_47 {dimension_numbers = #tpu.dot_dimension_numbers<[1], [0], [0], [1], [0, 0, 1, 1], [], []>} : vector<8x32xf32>, vector<32x128xf32>, vector<8x128xf32> -> vector<8x128xf32>
    %c0_48 = arith.constant 0 : index
    %c0_49 = arith.constant 0 : index
    %96 = vector.load %arg14[%c0_48, %c0_49] : memref<1x128xf32, #tpu.memory_space<vmem>>, vector<1x128xf32>
    %97 = vector.broadcast %96 : vector<1x128xf32> to vector<8x128xf32>
    %98 = arith.addf %95, %97 : vector<8x128xf32>
    %c0_50 = arith.constant 0 : index
    %c0_51 = arith.constant 0 : index
    %99 = vector.load %arg15[%c0_50, %c0_51] : memref<8x128xf32, #tpu.memory_space<vmem>>, vector<8x128xf32>
    tpu.vector_store %arg15[%c0_50, %c0_51], %98 {strides = array<i32>} : memref<8x128xf32, #tpu.memory_space<vmem>>, vector<8x128xf32>,
    return
  }
}

</mosaic_0001>

<llo_original>
// kernel: tpu_custom_call.1
$region0: #{tpu_custom_call.1}
  #allocation0 [shape = 'u32[]', space=smem, size = 0x4, offset = 0x4, fixed_abs, tag = 'smem constant byte address 0x4 - core index']
  #allocation1 [shape = 'u32[144,128]{1,0:T(1,128)}', space=vmem, size = 0x12000, scoped, tag = 'internal scratch']
  %s0 = inlined_call_operand.hbm [shape: f32[8,32], index: 0, kind: input, shape index: {}]
  %s1 = inlined_call_operand.hbm [shape: f32[32,96], index: 1, kind: input, shape index: {}]
  %s2 = inlined_call_operand.vmem [shape: f32[1,96], index: 2, kind: input, shape index: {}]
  %s3 = inlined_call_operand.hbm [shape: f32[32,32], index: 3, kind: input, shape index: {}]
  %s4 = inlined_call_operand.hbm [shape: f32[1,32], index: 4, kind: input, shape index: {}]
  %s5 = inlined_call_operand.hbm [shape: f32[1,32], index: 5, kind: input, shape index: {}]
  %s6 = inlined_call_operand.hbm [shape: f32[1,32], index: 6, kind: input, shape index: {}]
  %s7 = inlined_call_operand.hbm [shape: bf16[32,2048], index: 7, kind: input, shape index: {}]
  %s8 = inlined_call_operand.vmem [shape: f32[1,2048], index: 8, kind: input, shape index: {}]
  %s9 = inlined_call_operand.hbm [shape: bf16[32,2048], index: 9, kind: input, shape index: {}]
  %s10 = inlined_call_operand.hbm [shape: f32[1,32], index: 10, kind: input, shape index: {}]
  %s11 = inlined_call_operand.hbm [shape: f32[1,32], index: 11, kind: input, shape index: {}]
  %s12 = inlined_call_operand.hbm [shape: f32[1,32], index: 12, kind: input, shape index: {}]
  %s13 = inlined_call_operand.vmem [shape: f32[32,128], index: 13, kind: input, shape index: {}]
  %s14 = inlined_call_operand.vmem [shape: f32[1,128], index: 14, kind: input, shape index: {}]
  %s15 = inlined_call_operand.hbm [shape: f32[8,128], index: 15, kind: output, shape index: {}]
  %s16 = sld [smem:[#allocation0]]
  $region114: #{tpu_custom_call.1} parent=0
    _
  %s18 = ssub.s32 1, %s16
  %s19 = scalar_select 0, %s18, %s16
  $region1: #{tpu_custom_call.1} parent=0
    #allocation2 [shape = 'u8[4096]{0}', space=vmem, size = 0x1000, scoped, tag = 'input window, operand 0, single buffered']
    #allocation3 [shape = 's32[1]{0}', space=sflag, size = 0x4, scoped, tag = 'scoped memory for tpu_custom_call.1']
    #allocation4 [shape = 's32[1]{0}', space=sflag, size = 0x4, scoped, tag = 'scoped memory for tpu_custom_call.1']
    #allocation5 [shape = 'u8[16384]{0}', space=vmem, size = 0x4000, scoped, tag = 'input window, operand 1, single buffered']
    #allocation6 [shape = 's32[1]{0}', space=sflag, size = 0x4, scoped, tag = 'scoped memory for tpu_custom_call.1']
    #allocation7 [shape = 'u8[16384]{0}', space=vmem, size = 0x4000, scoped, tag = 'input window, operand 3, single buffered']
    #allocation8 [shape = 'u8[512]{0}', space=vmem, size = 0x400, scoped, tag = 'input window, operand 4, single buffered']
    #allocation9 [shape = 's32[1]{0}', space=sflag, size = 0x4, scoped, tag = 'scoped memory for tpu_custom_call.1']
    #allocation10 [shape = 'u8[512]{0}', space=vmem, size = 0x400, scoped, tag = 'input window, operand 5, single buffered']
    #allocation11 [shape = 'u8[512]{0}', space=vmem, size = 0x400, scoped, tag = 'input window, operand 6, single buffered']
    #allocation12 [shape = 's32[1]{0}', space=sflag, size = 0x4, scoped, tag = 'scoped memory for tpu_custom_call.1']
    #allocation13 [shape = 'u8[131072]{0}', space=vmem, size = 0x20000, scoped, tag = 'input window, operand 7, single buffered']
    #allocation14 [shape = 'u8[131072]{0}', space=vmem, size = 0x20000, scoped, tag = 'input window, operand 9, single buffered']
    #allocation15 [shape = 's32[1]{0}', space=sflag, size = 0x4, scoped, tag = 'scoped memory for tpu_custom_call.1']
    #allocation16 [shape = 'u8[512]{0}', space=vmem, size = 0x400, scoped, tag = 'input window, operand 10, single buffered']
    #allocation17 [shape = 'u8[512]{0}', space=vmem, size = 0x400, scoped, tag = 'input window, operand 11, single buffered']
    #allocation18 [shape = 's32[1]{0}', space=sflag, size = 0x4, scoped, tag = 'scoped memory for tpu_custom_call.1']
    #allocation19 [shape = 'u8[512]{0}', space=vmem, size = 0x400, scoped, tag = 'input window, operand 12, single buffered']
    #allocation20 [shape = 'u8[4096]{0}', space=vmem, size = 0x1000, scoped, tag = 'output window, operand 0, single buffered']
    %20 = vsyncpa [#allocation3], 0
    %21 = vsyncpa [#allocation6], 0
    %22 = vsyncpa [#allocation9], 0
    %23 = vsyncpa [#allocation12], 0
    %24 = vsyncpa [#allocation15], 0
    %25 = vsyncpa [#allocation18], 0
    %26 = vsyncpa [#allocation4], 0
    // Predicated region
    $region2: #{tpu_custom_call.1} parent=1 // pred_check
      _
    $region3: #{tpu_custom_call.1} parent=1 // pred_check_branch
      %28 = sbr.rel (0) target = $region5
    $region4: #{tpu_custom_call.1} parent=1 // pred_region
      %s30 = ssub.s32 128, 128
      %31 = vsyncadd [#allocation3], %s30
      %s33 = sshll.u32 [#allocation2], 4
      %s34 = int_to_ptr.vmem [resolvable:$true] %s33
      %36 = dma.hbm_to_vmem [thread:$0]  %s0, 128, %s34, [#allocation3]
    $region5: #{tpu_custom_call.1} parent=1 // pred_fallthru
      _
    // Predicated region
    $region6: #{tpu_custom_call.1} parent=1 // pred_check
      _
    $region7: #{tpu_custom_call.1} parent=1 // pred_check_branch
      %38 = sbr.rel (0) target = $region9
    $region8: #{tpu_custom_call.1} parent=1 // pred_region
      %s40 = ssub.s32 512, 512
      %41 = vsyncadd [#allocation6], %s40
      %s42 = sshll.u32 [#allocation5], 4
      %s43 = int_to_ptr.vmem [resolvable:$true] %s42
      %48 = dma.hbm_to_vmem [thread:$0]  %s1, 512, %s43, [#allocation6], 128, 128, 8
    $region9: #{tpu_custom_call.1} parent=1 // pred_fallthru
      _
    // Predicated region
    $region10: #{tpu_custom_call.1} parent=1 // pred_check
      _
    $region11: #{tpu_custom_call.1} parent=1 // pred_check_branch
      %50 = sbr.rel (0) target = $region13
    $region12: #{tpu_custom_call.1} parent=1 // pred_region
      _
    $region13: #{tpu_custom_call.1} parent=1 // pred_fallthru
      _
    // Predicated region
    $region14: #{tpu_custom_call.1} parent=1 // pred_check
      _
    $region15: #{tpu_custom_call.1} parent=1 // pred_check_branch
      %52 = sbr.rel (0) target = $region17
    $region16: #{tpu_custom_call.1} parent=1 // pred_region
      %s54 = ssub.s32 512, 512
      %55 = vsyncadd [#allocation6], %s54
      %s56 = sshll.u32 [#allocation7], 4
      %s57 = int_to_ptr.vmem [resolvable:$true] %s56
      %62 = dma.hbm_to_vmem [thread:$0]  %s3, 512, %s57, [#allocation6], 128, 128, 8
    $region17: #{tpu_custom_call.1} parent=1 // pred_fallthru
      _
    // Predicated region
    $region18: #{tpu_custom_call.1} parent=1 // pred_check
      _
    $region19: #{tpu_custom_call.1} parent=1 // pred_check_branch
      %64 = sbr.rel (0) target = $region21
    $region20: #{tpu_custom_call.1} parent=1 // pred_region
      %s66 = ssub.s32 16, 16
      %67 = vsyncadd [#allocation9], %s66
      %s69 = sshll.u32 [#allocation8], 4
      %s70 = int_to_ptr.vmem [resolvable:$true] %s69
      %72 = dma.hbm_to_vmem [thread:$0]  %s4, 16, %s70, [#allocation9]
    $region21: #{tpu_custom_call.1} parent=1 // pred_fallthru
      _
    // Predicated region
    $region22: #{tpu_custom_call.1} parent=1 // pred_check
      _
    $region23: #{tpu_custom_call.1} parent=1 // pred_check_branch
      %74 = sbr.rel (0) target = $region25
    $region24: #{tpu_custom_call.1} parent=1 // pred_region
      %s76 = ssub.s32 16, 16
      %77 = vsyncadd [#allocation9], %s76
      %s79 = sshll.u32 [#allocation10], 4
      %s80 = int_to_ptr.vmem [resolvable:$true] %s79
      %82 = dma.hbm_to_vmem [thread:$0]  %s5, 16, %s80, [#allocation9]
    $region25: #{tpu_custom_call.1} parent=1 // pred_fallthru
      _
    // Predicated region
    $region26: #{tpu_custom_call.1} parent=1 // pred_check
      _
    $region27: #{tpu_custom_call.1} parent=1 // pred_check_branch
      %84 = sbr.rel (0) target = $region29
    $region28: #{tpu_custom_call.1} parent=1 // pred_region
      %s86 = ssub.s32 16, 16
      %87 = vsyncadd [#allocation12], %s86
      %s89 = sshll.u32 [#allocation11], 4
      %s90 = int_to_ptr.vmem [resolvable:$true] %s89
      %92 = dma.hbm_to_vmem [thread:$0]  %s6, 16, %s90, [#allocation12]
    $region29: #{tpu_custom_call.1} parent=1 // pred_fallthru
      _
    // Predicated region
    $region30: #{tpu_custom_call.1} parent=1 // pred_check
      _
    $region31: #{tpu_custom_call.1} parent=1 // pred_check_branch
      %94 = sbr.rel (0) target = $region33
    $region32: #{tpu_custom_call.1} parent=1 // pred_region
      %s96 = ssub.s32 4096, 4096
      %97 = vsyncadd [#allocation12], %s96
      %s98 = sshll.u32 [#allocation13], 4
      %s99 = int_to_ptr.vmem [resolvable:$true] %s98
      %104 = dma.hbm_to_vmem [thread:$0]  %s7, 4096, %s99, [#allocation12], 1024, 1024, 64
    $region33: #{tpu_custom_call.1} parent=1 // pred_fallthru
      _
    // Predicated region
    $region34: #{tpu_custom_call.1} parent=1 // pred_check
      _
    $region35: #{tpu_custom_call.1} parent=1 // pred_check_branch
      %106 = sbr.rel (0) target = $region37
    $region36: #{tpu_custom_call.1} parent=1 // pred_region
      _
    $region37: #{tpu_custom_call.1} parent=1 // pred_fallthru
      _
    // Predicated region
    $region38: #{tpu_custom_call.1} parent=1 // pred_check
      _
    $region39: #{tpu_custom_call.1} parent=1 // pred_check_branch
      %108 = sbr.rel (0) target = $region41
    $region40: #{tpu_custom_call.1} parent=1 // pred_region
      %s110 = ssub.s32 4096, 4096
      %111 = vsyncadd [#allocation15], %s110
      %s112 = sshll.u32 [#allocation14], 4
      %s113 = int_to_ptr.vmem [resolvable:$true] %s112
      %118 = dma.hbm_to_vmem [thread:$0]  %s9, 4096, %s113, [#allocation15], 1024, 1024, 64
    $region41: #{tpu_custom_call.1} parent=1 // pred_fallthru
      _
    // Predicated region
    $region42: #{tpu_custom_call.1} parent=1 // pred_check
      _
    $region43: #{tpu_custom_call.1} parent=1 // pred_check_branch
      %120 = sbr.rel (0) target = $region45
    $region44: #{tpu_custom_call.1} parent=1 // pred_region
      %s122 = ssub.s32 16, 16
      %123 = vsyncadd [#allocation15], %s122
      %s125 = sshll.u32 [#allocation16], 4
      %s126 = int_to_ptr.vmem [resolvable:$true] %s125
      %128 = dma.hbm_to_vmem [thread:$0]  %s10, 16, %s126, [#allocation15]
    $region45: #{tpu_custom_call.1} parent=1 // pred_fallthru
      _
    // Predicated region
    $region46: #{tpu_custom_call.1} parent=1 // pred_check
      _
    $region47: #{tpu_custom_call.1} parent=1 // pred_check_branch
      %130 = sbr.rel (0) target = $region49
    $region48: #{tpu_custom_call.1} parent=1 // pred_region
      %s132 = ssub.s32 16, 16
      %133 = vsyncadd [#allocation18], %s132
      %s135 = sshll.u32 [#allocation17], 4
      %s136 = int_to_ptr.vmem [resolvable:$true] %s135
      %138 = dma.hbm_to_vmem [thread:$0]  %s11, 16, %s136, [#allocation18]
    $region49: #{tpu_custom_call.1} parent=1 // pred_fallthru
      _
    // Predicated region
    $region50: #{tpu_custom_call.1} parent=1 // pred_check
      _
    $region51: #{tpu_custom_call.1} parent=1 // pred_check_branch
      %140 = sbr.rel (0) target = $region53
    $region52: #{tpu_custom_call.1} parent=1 // pred_region
      %s142 = ssub.s32 16, 16
      %143 = vsyncadd [#allocation18], %s142
      %s145 = sshll.u32 [#allocation19], 4
      %s146 = int_to_ptr.vmem [resolvable:$true] %s145
      %148 = dma.hbm_to_vmem [thread:$0]  %s12, 16, %s146, [#allocation18]
    $region53: #{tpu_custom_call.1} parent=1 // pred_fallthru
      _
    // Predicated region
    $region54: #{tpu_custom_call.1} parent=1 // pred_check
      _
    $region55: #{tpu_custom_call.1} parent=1 // pred_check_branch
      %150 = sbr.rel (0) target = $region57
    $region56: #{tpu_custom_call.1} parent=1 // pred_region
      _
    $region57: #{tpu_custom_call.1} parent=1 // pred_fallthru
      _
    // Predicated region
    $region58: #{tpu_custom_call.1} parent=1 // pred_check
      _
    $region59: #{tpu_custom_call.1} parent=1 // pred_check_branch
      %152 = sbr.rel (0) target = $region61
    $region60: #{tpu_custom_call.1} parent=1 // pred_region
      _
    $region61: #{tpu_custom_call.1} parent=1 // pred_fallthru
      _
    // Predicated region
    $region62: #{tpu_custom_call.1} parent=1 // pred_check
      _
    $region63: #{tpu_custom_call.1} parent=1 // pred_check_branch
      %154 = sbr.rel (0) target = $region65
    $region64: #{tpu_custom_call.1} parent=1 // pred_region
      %155 = dma.done [#allocation3], 128
    $region65: #{tpu_custom_call.1} parent=1 // pred_fallthru
      _
    // Predicated region
    $region66: #{tpu_custom_call.1} parent=1 // pred_check
      _
    $region67: #{tpu_custom_call.1} parent=1 // pred_check_branch
      %157 = sbr.rel (0) target = $region69
    $region68: #{tpu_custom_call.1} parent=1 // pred_region
      %158 = dma.done [#allocation6], 512
    $region69: #{tpu_custom_call.1} parent=1 // pred_fallthru
      _
    // Predicated region
    $region70: #{tpu_custom_call.1} parent=1 // pred_check
      _
    $region71: #{tpu_custom_call.1} parent=1 // pred_check_branch
      %160 = sbr.rel (0) target = $region73
    $region72: #{tpu_custom_call.1} parent=1 // pred_region
      %161 = dma.done [#allocation6], 512
    $region73: #{tpu_custom_call.1} parent=1 // pred_fallthru
      _
    // Predicated region
    $region74: #{tpu_custom_call.1} parent=1 // pred_check
      _
    $region75: #{tpu_custom_call.1} parent=1 // pred_check_branch
      %163 = sbr.rel (0) target = $region77
    $region76: #{tpu_custom_call.1} parent=1 // pred_region
      %164 = dma.done [#allocation9], 16
    $region77: #{tpu_custom_call.1} parent=1 // pred_fallthru
      _
    // Predicated region
    $region78: #{tpu_custom_call.1} parent=1 // pred_check
      _
    $region79: #{tpu_custom_call.1} parent=1 // pred_check_branch
      %166 = sbr.rel (0) target = $region81
    $region80: #{tpu_custom_call.1} parent=1 // pred_region
      %167 = dma.done [#allocation9], 16
    $region81: #{tpu_custom_call.1} parent=1 // pred_fallthru
      _
    // Predicated region
    $region82: #{tpu_custom_call.1} parent=1 // pred_check
      _
    $region83: #{tpu_custom_call.1} parent=1 // pred_check_branch
      %169 = sbr.rel (0) target = $region85
    $region84: #{tpu_custom_call.1} parent=1 // pred_region
      %170 = dma.done [#allocation12], 16
    $region85: #{tpu_custom_call.1} parent=1 // pred_fallthru
      _
    // Predicated region
    $region86: #{tpu_custom_call.1} parent=1 // pred_check
      _
    $region87: #{tpu_custom_call.1} parent=1 // pred_check_branch
      %172 = sbr.rel (0) target = $region89
    $region88: #{tpu_custom_call.1} parent=1 // pred_region
      %173 = dma.done [#allocation12], 4096
    $region89: #{tpu_custom_call.1} parent=1 // pred_fallthru
      _
    // Predicated region
    $region90: #{tpu_custom_call.1} parent=1 // pred_check
      _
    $region91: #{tpu_custom_call.1} parent=1 // pred_check_branch
      %175 = sbr.rel (0) target = $region93
    $region92: #{tpu_custom_call.1} parent=1 // pred_region
      %176 = dma.done [#allocation15], 4096
    $region93: #{tpu_custom_call.1} parent=1 // pred_fallthru
      _
    // Predicated region
    $region94: #{tpu_custom_call.1} parent=1 // pred_check
      _
    $region95: #{tpu_custom_call.1} parent=1 // pred_check_branch
      %178 = sbr.rel (0) target = $region97
    $region96: #{tpu_custom_call.1} parent=1 // pred_region
      %179 = dma.done [#allocation15], 16
    $region97: #{tpu_custom_call.1} parent=1 // pred_fallthru
      _
    // Predicated region
    $region98: #{tpu_custom_call.1} parent=1 // pred_check
      _
    $region99: #{tpu_custom_call.1} parent=1 // pred_check_branch
      %181 = sbr.rel (0) target = $region101
    $region100: #{tpu_custom_call.1} parent=1 // pred_region
      %182 = dma.done [#allocation18], 16
    $region101: #{tpu_custom_call.1} parent=1 // pred_fallthru
      _
    // Predicated region
    $region102: #{tpu_custom_call.1} parent=1 // pred_check
      _
    $region103: #{tpu_custom_call.1} parent=1 // pred_check_branch
      %184 = sbr.rel (0) target = $region105
    $region104: #{tpu_custom_call.1} parent=1 // pred_region
      %185 = dma.done [#allocation18], 16
    $region105: #{tpu_custom_call.1} parent=1 // pred_fallthru
      _
    %v187 = vld [vmem:[#allocation2] sm:$0xff]
    %v188 = vld [vmem:[#allocation5] sm:$0xff]
    %v189 = vld [vmem:[#allocation5 + $0x8] sm:$0xff]
    %v190 = vld [vmem:[#allocation5 + $0x10] sm:$0xff]
    %v191 = vld [vmem:[#allocation5 + $0x18] sm:$0xff]
    %v192 = vld [vmem:[%s2] sm:$0x1]
    %v194 = vlaneseq
    %v195 = vshrl.u32 %v194, 7
    %v196 = vsub.s32 0, %v195
    %v197 = vrot.slane %v192, %v196
    %vm199 = vcmask 261120
    %v201 = vsel %vm199, %v187, 0
    %203 = vmatprep.subr.mxu0 0.0
    %204 = vmatpush1.msra.mxu0 %v188
    %205 = vmatprep.subr.mxu0 0.0
    %206 = vmatpush1.msra.mxu0 %v189
    %207 = vmatprep.subr.mxu0 0.0
    %208 = vmatpush1.msra.mxu0 %v190
    %209 = vmatprep.subr.mxu0 0.0
    %210 = vmatpush1.msra.mxu0 %v191
    %211 = vmatprep.subr.mxu0 0.0
    %212 = vmatpush1.msra.mxu0 0.0
    %213 = vmatprep.subr.mxu0 0.0
    %214 = vmatpush1.msra.mxu0 0.0
    %215 = vmatprep.subr.mxu0 0.0
    %216 = vmatpush1.msra.mxu0 0.0
    %217 = vmatprep.subr.mxu0 0.0
    %218 = vmatpush1.msra.mxu0 0.0
    %219 = vmatprep.subr.mxu0 0.0
    %220 = vmatpush1.msra.mxu0 0.0
    %221 = vmatprep.subr.mxu0 0.0
    %222 = vmatpush1.msra.mxu0 0.0
    %223 = vmatprep.subr.mxu0 0.0
    %224 = vmatpush1.msra.mxu0 0.0
    %225 = vmatprep.subr.mxu0 0.0
    %226 = vmatpush1.msra.mxu0 0.0
    %227 = vmatprep.subr.mxu0 0.0
    %228 = vmatpush1.msra.mxu0 0.0
    %229 = vmatprep.subr.mxu0 0.0
    %230 = vmatpush1.msra.mxu0 0.0
    %231 = vmatprep.subr.mxu0 0.0
    %232 = vmatpush1.msra.mxu0 0.0
    %233 = vmatprep.subr.mxu0 0.0
    %234 = vmatpush1.msra.mxu0 0.0
    %235 = vmatprep.subr.mxu0 0.0
    %236 = vmatpush1.msra.mxu0 0.0
    %237 = vmatprep.subr.mxu0 0.0
    %238 = vmatpush1.msra.mxu0 0.0
    %239 = vmatprep.subr.mxu0 0.0
    %240 = vmatpush1.msra.mxu0 0.0
    %241 = vmatprep.subr.mxu0 0.0
    %242 = vmatpush1.msra.mxu0 0.0
    %243 = vmatprep.subr.mxu0 0.0
    %244 = vmatpush1.msra.mxu0 0.0
    %245 = vmatprep.subr.mxu0 0.0
    %246 = vmatpush1.msra.mxu0 0.0
    %247 = vmatprep.subr.mxu0 0.0
    %248 = vmatpush1.msra.mxu0 0.0
    %249 = vmatprep.subr.mxu0 0.0
    %250 = vmatpush1.msra.mxu0 0.0
    %251 = vmatprep.subr.mxu0 0.0
    %252 = vmatpush1.msra.mxu0 0.0
    %253 = vmatprep.subr.mxu0 0.0
    %254 = vmatpush1.msra.mxu0 0.0
    %255 = vmatprep.subr.mxu0 0.0
    %256 = vmatpush1.msra.mxu0 0.0
    %257 = vmatprep.subr.mxu0 0.0
    %258 = vmatpush1.msra.mxu0 0.0
    %259 = vmatprep.subr.mxu0 0.0
    %260 = vmatpush1.msra.mxu0 0.0
    %261 = vmatprep.subr.mxu0 0.0
    %262 = vmatpush1.msra.mxu0 0.0
    %263 = vmatprep.subr.mxu0 0.0
    %264 = vmatpush1.msra.mxu0 0.0
    %265 = vmatprep.subr.mxu0 0.0
    %266 = vmatpush1.msra.mxu0 0.0
    %267 = vmatprep.mubr.f32.mxu0 0.0
    %268 = vmatmul.mubr.f32.gmra.mrb[0].mxu0 %v201
    %v269 = vpop.f32.mrb[0].mxu0
    %v270 = vadd.f32 %v197, %v269
    %v271 = vpop.f32.mrb[0].mxu0
    %272 = vdwg.mxu0
    %274 = vrot.lane.b32.xlu0 %v270, 96
    %v275 = vpop.permute.xlu0 %274
    %v276 = vsel %vm199, %v270, 0
    %v278 = vsel %vm199, %v275, 0
    %280 = vmatprep.subr.mxu0 0.0
    %281 = vmatpush1.xpose.msra.mxu0 %v278
    %282 = vmatprep.subr.mxu0 0.0
    %283 = vmatpush1.xpose.msra.mxu0 0.0
    %284 = vmatprep.subr.mxu0 0.0
    %285 = vmatpush1.xpose.msra.mxu0 0.0
    %286 = vmatprep.subr.mxu0 0.0
    %287 = vmatpush1.xpose.msra.mxu0 0.0
    %288 = vmatprep.subr.mxu0 0.0
    %289 = vmatpush1.xpose.msra.mxu0 0.0
    %290 = vmatprep.subr.mxu0 0.0
    %291 = vmatpush1.xpose.msra.mxu0 0.0
    %292 = vmatprep.subr.mxu0 0.0
    %293 = vmatpush1.xpose.msra.mxu0 0.0
    %294 = vmatprep.subr.mxu0 0.0
    %295 = vmatpush1.xpose.msra.mxu0 0.0
    %296 = vmatprep.subr.mxu0 0.0
    %297 = vmatpush1.xpose.msra.mxu0 0.0
    %298 = vmatprep.subr.mxu0 0.0
    %299 = vmatpush1.xpose.msra.mxu0 0.0
    %300 = vmatprep.subr.mxu0 0.0
    %301 = vmatpush1.xpose.msra.mxu0 0.0
    %302 = vmatprep.subr.mxu0 0.0
    %303 = vmatpush1.xpose.msra.mxu0 0.0
    %304 = vmatprep.subr.mxu0 0.0
    %305 = vmatpush1.xpose.msra.mxu0 0.0
    %306 = vmatprep.subr.mxu0 0.0
    %307 = vmatpush1.xpose.msra.mxu0 0.0
    %308 = vmatprep.subr.mxu0 0.0
    %309 = vmatpush1.xpose.msra.mxu0 0.0
    %310 = vmatprep.subr.mxu0 0.0
    %311 = vmatpush1.xpose.msra.mxu0 0.0
    %312 = vmatprep.subr.mxu0 0.0
    %313 = vmatpush1.xpose.msra.mxu0 0.0
    %314 = vmatprep.subr.mxu0 0.0
    %315 = vmatpush1.xpose.msra.mxu0 0.0
    %316 = vmatprep.subr.mxu0 0.0
    %317 = vmatpush1.xpose.msra.mxu0 0.0
    %318 = vmatprep.subr.mxu0 0.0
    %319 = vmatpush1.xpose.msra.mxu0 0.0
    %320 = vmatprep.subr.mxu0 0.0
    %321 = vmatpush1.xpose.msra.mxu0 0.0
    %322 = vmatprep.subr.mxu0 0.0
    %323 = vmatpush1.xpose.msra.mxu0 0.0
    %324 = vmatprep.subr.mxu0 0.0
    %325 = vmatpush1.xpose.msra.mxu0 0.0
    %326 = vmatprep.subr.mxu0 0.0
    %327 = vmatpush1.xpose.msra.mxu0 0.0
    %328 = vmatprep.subr.mxu0 0.0
    %329 = vmatpush1.xpose.msra.mxu0 0.0
    %330 = vmatprep.subr.mxu0 0.0
    %331 = vmatpush1.xpose.msra.mxu0 0.0
    %332 = vmatprep.subr.mxu0 0.0
    %333 = vmatpush1.xpose.msra.mxu0 0.0
    %334 = vmatprep.subr.mxu0 0.0
    %335 = vmatpush1.xpose.msra.mxu0 0.0
    %336 = vmatprep.subr.mxu0 0.0
    %337 = vmatpush1.xpose.msra.mxu0 0.0
    %338 = vmatprep.subr.mxu0 0.0
    %339 = vmatpush1.xpose.msra.mxu0 0.0
    %340 = vmatprep.subr.mxu0 0.0
    %341 = vmatpush1.xpose.msra.mxu0 0.0
    %342 = vmatprep.subr.mxu0 0.0
    %343 = vmatpush1.xpose.msra.mxu0 0.0
    %344 = vmatprep.mubr.f32.mxu0 0.0
    %345 = vmatmul.mubr.f32.gmra.mrb[0].mxu0 %v276
    %v346 = vpop.f32.mrb[0].mxu0
    %v347 = vadd.f32 0.0, %v346
    %v348 = vpop.f32.mrb[0].mxu0
    %349 = vdwg.mxu0
    %v350 = vmul.f32 %v347, 0.17677669
    %vm351 = vcmask 64512
    %v352 = vsel %vm351, %v350, -inf
    %353 = vmax.xlane.f32.xlu0 %v352
    %v354 = vpop.xlane.xlu0 %353
    %v355 = vsub.f32 %v350, %v354
    %v356 = vmul.f32 %v355, 1.442695
    %v357 = vpow.pop %v356
    %v358 = vsel %vm351, %v357, 0.0
    %359 = vadd.xlane.f32.xlu0 %v358
    %v360 = vpop.xlane.xlu0 %359
    %v361 = vrcp.pop %v360
    %v362 = vmul.f32 %v357, %v361
    %363 = vrot.lane.b32.xlu0 %v270, 64
    %v364 = vpop.permute.xlu0 %363
    %v367 = vsel %vm351, %v362, 0
    %369 = vmatprep.subr.mxu0 0.0
    %370 = vmatpush1.msra.mxu0 %v364
    %371 = vmatprep.subr.mxu0 0.0
    %372 = vmatpush1.msra.mxu0 0.0
    %373 = vmatprep.subr.mxu0 0.0
    %374 = vmatpush1.msra.mxu0 0.0
    %375 = vmatprep.subr.mxu0 0.0
    %376 = vmatpush1.msra.mxu0 0.0
    %377 = vmatprep.subr.mxu0 0.0
    %378 = vmatpush1.msra.mxu0 0.0
    %379 = vmatprep.subr.mxu0 0.0
    %380 = vmatpush1.msra.mxu0 0.0
    %381 = vmatprep.subr.mxu0 0.0
    %382 = vmatpush1.msra.mxu0 0.0
    %383 = vmatprep.subr.mxu0 0.0
    %384 = vmatpush1.msra.mxu0 0.0
    %385 = vmatprep.subr.mxu0 0.0
    %386 = vmatpush1.msra.mxu0 0.0
    %387 = vmatprep.subr.mxu0 0.0
    %388 = vmatpush1.msra.mxu0 0.0
    %389 = vmatprep.subr.mxu0 0.0
    %390 = vmatpush1.msra.mxu0 0.0
    %391 = vmatprep.subr.mxu0 0.0
    %392 = vmatpush1.msra.mxu0 0.0
    %393 = vmatprep.subr.mxu0 0.0
    %394 = vmatpush1.msra.mxu0 0.0
    %395 = vmatprep.subr.mxu0 0.0
    %396 = vmatpush1.msra.mxu0 0.0
    %397 = vmatprep.subr.mxu0 0.0
    %398 = vmatpush1.msra.mxu0 0.0
    %399 = vmatprep.subr.mxu0 0.0
    %400 = vmatpush1.msra.mxu0 0.0
    %401 = vmatprep.subr.mxu0 0.0
    %402 = vmatpush1.msra.mxu0 0.0
    %403 = vmatprep.subr.mxu0 0.0
    %404 = vmatpush1.msra.mxu0 0.0
    %405 = vmatprep.subr.mxu0 0.0
    %406 = vmatpush1.msra.mxu0 0.0
    %407 = vmatprep.subr.mxu0 0.0
    %408 = vmatpush1.msra.mxu0 0.0
    %409 = vmatprep.subr.mxu0 0.0
    %410 = vmatpush1.msra.mxu0 0.0
    %411 = vmatprep.subr.mxu0 0.0
    %412 = vmatpush1.msra.mxu0 0.0
    %413 = vmatprep.subr.mxu0 0.0
    %414 = vmatpush1.msra.mxu0 0.0
    %415 = vmatprep.subr.mxu0 0.0
    %416 = vmatpush1.msra.mxu0 0.0
    %417 = vmatprep.subr.mxu0 0.0
    %418 = vmatpush1.msra.mxu0 0.0
    %419 = vmatprep.subr.mxu0 0.0
    %420 = vmatpush1.msra.mxu0 0.0
    %421 = vmatprep.subr.mxu0 0.0
    %422 = vmatpush1.msra.mxu0 0.0
    %423 = vmatprep.subr.mxu0 0.0
    %424 = vmatpush1.msra.mxu0 0.0
    %425 = vmatprep.subr.mxu0 0.0
    %426 = vmatpush1.msra.mxu0 0.0
    %427 = vmatprep.subr.mxu0 0.0
    %428 = vmatpush1.msra.mxu0 0.0
    %429 = vmatprep.subr.mxu0 0.0
    %430 = vmatpush1.msra.mxu0 0.0
    %431 = vmatprep.subr.mxu0 0.0
    %432 = vmatpush1.msra.mxu0 0.0
    %433 = vmatprep.mubr.f32.mxu0 0.0
    %434 = vmatmul.mubr.f32.gmra.mrb[0].mxu0 %v367
    %v435 = vpop.f32.mrb[0].mxu0
    %v436 = vadd.f32 0.0, %v435
    %v437 = vpop.f32.mrb[0].mxu0
    %438 = vdwg.mxu0
    %v439 = vld [vmem:[#allocation7] sm:$0xff]
    %v440 = vld [vmem:[#allocation7 + $0x8] sm:$0xff]
    %v441 = vld [vmem:[#allocation7 + $0x10] sm:$0xff]
    %v442 = vld [vmem:[#allocation7 + $0x18] sm:$0xff]
    %v443 = vld [vmem:[#allocation8] sm:$0x1]
    %v445 = vlaneseq
    %v446 = vshrl.u32 %v445, 7
    %v447 = vsub.s32 0, %v446
    %v448 = vrot.slane %v443, %v447
    %v451 = vsel %vm199, %v436, 0
    %453 = vmatprep.subr.mxu0 0.0
    %454 = vmatpush1.msra.mxu0 %v439
    %455 = vmatprep.subr.mxu0 0.0
    %456 = vmatpush1.msra.mxu0 %v440
    %457 = vmatprep.subr.mxu0 0.0
    %458 = vmatpush1.msra.mxu0 %v441
    %459 = vmatprep.subr.mxu0 0.0
    %460 = vmatpush1.msra.mxu0 %v442
    %461 = vmatprep.subr.mxu0 0.0
    %462 = vmatpush1.msra.mxu0 0.0
    %463 = vmatprep.subr.mxu0 0.0
    %464 = vmatpush1.msra.mxu0 0.0
    %465 = vmatprep.subr.mxu0 0.0
    %466 = vmatpush1.msra.mxu0 0.0
    %467 = vmatprep.subr.mxu0 0.0
    %468 = vmatpush1.msra.mxu0 0.0
    %469 = vmatprep.subr.mxu0 0.0
    %470 = vmatpush1.msra.mxu0 0.0
    %471 = vmatprep.subr.mxu0 0.0
    %472 = vmatpush1.msra.mxu0 0.0
    %473 = vmatprep.subr.mxu0 0.0
    %474 = vmatpush1.msra.mxu0 0.0
    %475 = vmatprep.subr.mxu0 0.0
    %476 = vmatpush1.msra.mxu0 0.0
    %477 = vmatprep.subr.mxu0 0.0
    %478 = vmatpush1.msra.mxu0 0.0
    %479 = vmatprep.subr.mxu0 0.0
    %480 = vmatpush1.msra.mxu0 0.0
    %481 = vmatprep.subr.mxu0 0.0
    %482 = vmatpush1.msra.mxu0 0.0
    %483 = vmatprep.subr.mxu0 0.0
    %484 = vmatpush1.msra.mxu0 0.0
    %485 = vmatprep.subr.mxu0 0.0
    %486 = vmatpush1.msra.mxu0 0.0
    %487 = vmatprep.subr.mxu0 0.0
    %488 = vmatpush1.msra.mxu0 0.0
    %489 = vmatprep.subr.mxu0 0.0
    %490 = vmatpush1.msra.mxu0 0.0
    %491 = vmatprep.subr.mxu0 0.0
    %492 = vmatpush1.msra.mxu0 0.0
    %493 = vmatprep.subr.mxu0 0.0
    %494 = vmatpush1.msra.mxu0 0.0
    %495 = vmatprep.subr.mxu0 0.0
    %496 = vmatpush1.msra.mxu0 0.0
    %497 = vmatprep.subr.mxu0 0.0
    %498 = vmatpush1.msra.mxu0 0.0
    %499 = vmatprep.subr.mxu0 0.0
    %500 = vmatpush1.msra.mxu0 0.0
    %501 = vmatprep.subr.mxu0 0.0
    %502 = vmatpush1.msra.mxu0 0.0
    %503 = vmatprep.subr.mxu0 0.0
    %504 = vmatpush1.msra.mxu0 0.0
    %505 = vmatprep.subr.mxu0 0.0
    %506 = vmatpush1.msra.mxu0 0.0
    %507 = vmatprep.subr.mxu0 0.0
    %508 = vmatpush1.msra.mxu0 0.0
    %509 = vmatprep.subr.mxu0 0.0
    %510 = vmatpush1.msra.mxu0 0.0
    %511 = vmatprep.subr.mxu0 0.0
    %512 = vmatpush1.msra.mxu0 0.0
    %513 = vmatprep.subr.mxu0 0.0
    %514 = vmatpush1.msra.mxu0 0.0
    %515 = vmatprep.subr.mxu0 0.0
    %516 = vmatpush1.msra.mxu0 0.0
    %517 = vmatprep.mubr.f32.mxu0 0.0
    %518 = vmatmul.mubr.f32.gmra.mrb[0].mxu0 %v451
    %v519 = vpop.f32.mrb[0].mxu0
    %v520 = vadd.f32 %v448, %v519
    %v521 = vpop.f32.mrb[0].mxu0
    %522 = vdwg.mxu0
    %v523 = vadd.f32 %v187, %v520
    %v524 = vld [vmem:[#allocation10] sm:$0x1]
    %v525 = vld [vmem:[#allocation11] sm:$0x1]
    %v526 = vsel %vm199, %v523, 0.0
    %527 = vadd.xlane.f32.xlu0 %v526
    %v528 = vpop.xlane.xlu0 %527
    %v529 = vrcp.pop 32.0
    %v530 = vmul.f32 %v528, %v529
    %v531 = vsub.f32 %v523, %v530
    %v532 = vmul.f32 %v531, %v531
    %v533 = vsel %vm199, %v532, 0.0
    %534 = vadd.xlane.f32.xlu0 %v533
    %v535 = vpop.xlane.xlu0 %534
    %v536 = vmul.f32 %v535, %v529
    %v537 = vadd.f32 %v536, 1e-05
    %v538 = vrsqrt.pop %v537
    %v539 = vmul.f32 %v531, %v538
    %v541 = vlaneseq
    %v542 = vshrl.u32 %v541, 7
    %v543 = vsub.s32 0, %v542
    %v544 = vrot.slane %v524, %v543
    %v546 = vmul.f32 %v539, %v544
    %v548 = vlaneseq
    %v549 = vshrl.u32 %v548, 7
    %v550 = vsub.s32 0, %v549
    %v551 = vrot.slane %v525, %v550
    %v553 = vadd.f32 %v546, %v551
    %v554 = vpack.c.bf16 %v553, %v553
    %v555 = vld [vmem:[#allocation13] sm:$0xff]
    %v556 = vld [vmem:[#allocation13 + $0x8] sm:$0xff]
    %v557 = vld [vmem:[#allocation13 + $0x10] sm:$0xff]
    %v558 = vld [vmem:[#allocation13 + $0x18] sm:$0xff]
    %v559 = vld [vmem:[#allocation13 + $0x20] sm:$0xff]
    %v560 = vld [vmem:[#allocation13 + $0x28] sm:$0xff]
    %v561 = vld [vmem:[#allocation13 + $0x30] sm:$0xff]
    %v562 = vld [vmem:[#allocation13 + $0x38] sm:$0xff]
    %v563 = vld [vmem:[#allocation13 + $0x40] sm:$0xff]
    %v564 = vld [vmem:[#allocation13 + $0x48] sm:$0xff]
    %v565 = vld [vmem:[#allocation13 + $0x50] sm:$0xff]
    %v566 = vld [vmem:[#allocation13 + $0x58] sm:$0xff]
    %v567 = vld [vmem:[#allocation13 + $0x60] sm:$0xff]
    %v568 = vld [vmem:[#allocation13 + $0x68] sm:$0xff]
    %v569 = vld [vmem:[#allocation13 + $0x70] sm:$0xff]
    %v570 = vld [vmem:[#allocation13 + $0x78] sm:$0xff]
    %v571 = vld [vmem:[#allocation13 + $0x80] sm:$0xff]
    %v572 = vld [vmem:[#allocation13 + $0x88] sm:$0xff]
    %v573 = vld [vmem:[#allocation13 + $0x90] sm:$0xff]
    %v574 = vld [vmem:[#allocation13 + $0x98] sm:$0xff]
    %v575 = vld [vmem:[#allocation13 + $0xa0] sm:$0xff]
    %v576 = vld [vmem:[#allocation13 + $0xa8] sm:$0xff]
    %v577 = vld [vmem:[#allocation13 + $0xb0] sm:$0xff]
    %v578 = vld [vmem:[#allocation13 + $0xb8] sm:$0xff]
    %v579 = vld [vmem:[#allocation13 + $0xc0] sm:$0xff]
    %v580 = vld [vmem:[#allocation13 + $0xc8] sm:$0xff]
    %v581 = vld [vmem:[#allocation13 + $0xd0] sm:$0xff]
    %v582 = vld [vmem:[#allocation13 + $0xd8] sm:$0xff]
    %v583 = vld [vmem:[#allocation13 + $0xe0] sm:$0xff]
    %v584 = vld [vmem:[#allocation13 + $0xe8] sm:$0xff]
    %v585 = vld [vmem:[#allocation13 + $0xf0] sm:$0xff]
    %v586 = vld [vmem:[#allocation13 + $0xf8] sm:$0xff]
    %v587 = vld [vmem:[%s8] sm:$0xff]
    %v588 = vld [vmem:[%s8 + $0x8] sm:$0xff]
    %v591 = vlaneseq
    %v592 = vshrl.u32 %v591, 7
    %v593 = vsub.s32 0, %v592
    %v594 = vrot.slane %v587, %v593
    %v595 = vlaneseq
    %v596 = vshrl.u32 %v595, 7
    %v597 = vsub.s32 1, %v596
    %v598 = vrot.slane %v587, %v597
    %v599 = vlaneseq
    %v600 = vshrl.u32 %v599, 7
    %v601 = vsub.s32 2, %v600
    %v602 = vrot.slane %v587, %v601
    %v603 = vlaneseq
    %v604 = vshrl.u32 %v603, 7
    %v605 = vsub.s32 3, %v604
    %v606 = vrot.slane %v587, %v605
    %v607 = vlaneseq
    %v608 = vshrl.u32 %v607, 7
    %v609 = vsub.s32 4, %v608
    %v610 = vrot.slane %v587, %v609
    %v611 = vlaneseq
    %v612 = vshrl.u32 %v611, 7
    %v613 = vsub.s32 5, %v612
    %v614 = vrot.slane %v587, %v613
    %v615 = vlaneseq
    %v616 = vshrl.u32 %v615, 7
    %v617 = vsub.s32 6, %v616
    %v618 = vrot.slane %v587, %v617
    %v619 = vlaneseq
    %v620 = vshrl.u32 %v619, 7
    %v621 = vsub.s32 7, %v620
    %v622 = vrot.slane %v587, %v621
    %v623 = vlaneseq
    %v624 = vshrl.u32 %v623, 7
    %v625 = vsub.s32 0, %v624
    %v626 = vrot.slane %v588, %v625
    %v627 = vlaneseq
    %v628 = vshrl.u32 %v627, 7
    %v629 = vsub.s32 1, %v628
    %v630 = vrot.slane %v588, %v629
    %v631 = vlaneseq
    %v632 = vshrl.u32 %v631, 7
    %v633 = vsub.s32 2, %v632
    %v634 = vrot.slane %v588, %v633
    %v635 = vlaneseq
    %v636 = vshrl.u32 %v635, 7
    %v637 = vsub.s32 3, %v636
    %v638 = vrot.slane %v588, %v637
    %v639 = vlaneseq
    %v640 = vshrl.u32 %v639, 7
    %v641 = vsub.s32 4, %v640
    %v642 = vrot.slane %v588, %v641
    %v643 = vlaneseq
    %v644 = vshrl.u32 %v643, 7
    %v645 = vsub.s32 5, %v644
    %v646 = vrot.slane %v588, %v645
    %v647 = vlaneseq
    %v648 = vshrl.u32 %v647, 7
    %v649 = vsub.s32 6, %v648
    %v650 = vrot.slane %v588, %v649
    %v651 = vlaneseq
    %v652 = vshrl.u32 %v651, 7
    %v653 = vsub.s32 7, %v652
    %v654 = vrot.slane %v588, %v653
    %v703 = vunpack.c.l.b16 %v555
    %v704 = vunpack.c.h.b16 %v555
    %v705 = vunpack.c.l.b16 %v556
    %v706 = vunpack.c.h.b16 %v556
    %v707 = vunpack.c.l.b16 %v557
    %v708 = vunpack.c.h.b16 %v557
    %v709 = vunpack.c.l.b16 %v558
    %v710 = vunpack.c.h.b16 %v558
    %v711 = vunpack.c.l.b16 %v559
    %v712 = vunpack.c.h.b16 %v559
    %v713 = vunpack.c.l.b16 %v560
    %v714 = vunpack.c.h.b16 %v560
    %v715 = vunpack.c.l.b16 %v561
    %v716 = vunpack.c.h.b16 %v561
    %v717 = vunpack.c.l.b16 %v562
    %v718 = vunpack.c.h.b16 %v562
    %v719 = vunpack.c.l.b16 %v563
    %v720 = vunpack.c.h.b16 %v563
    %v721 = vunpack.c.l.b16 %v564
    %v722 = vunpack.c.h.b16 %v564
    %v723 = vunpack.c.l.b16 %v565
    %v724 = vunpack.c.h.b16 %v565
    %v725 = vunpack.c.l.b16 %v566
    %v726 = vunpack.c.h.b16 %v566
    %v727 = vunpack.c.l.b16 %v567
    %v728 = vunpack.c.h.b16 %v567
    %v729 = vunpack.c.l.b16 %v568
    %v730 = vunpack.c.h.b16 %v568
    %v731 = vunpack.c.l.b16 %v569
    %v732 = vunpack.c.h.b16 %v569
    %v733 = vunpack.c.l.b16 %v570
    %v734 = vunpack.c.h.b16 %v570
    %v735 = vunpack.c.l.b16 %v571
    %v736 = vunpack.c.h.b16 %v571
    %v737 = vunpack.c.l.b16 %v572
    %v738 = vunpack.c.h.b16 %v572
    %v739 = vunpack.c.l.b16 %v573
    %v740 = vunpack.c.h.b16 %v573
    %v741 = vunpack.c.l.b16 %v574
    %v742 = vunpack.c.h.b16 %v574
    %v743 = vunpack.c.l.b16 %v575
    %v744 = vunpack.c.h.b16 %v575
    %v745 = vunpack.c.l.b16 %v576
    %v746 = vunpack.c.h.b16 %v576
    %v747 = vunpack.c.l.b16 %v577
    %v748 = vunpack.c.h.b16 %v577
    %v749 = vunpack.c.l.b16 %v578
    %v750 = vunpack.c.h.b16 %v578
    %v751 = vunpack.c.l.b16 %v579
    %v752 = vunpack.c.h.b16 %v579
    %v753 = vunpack.c.l.b16 %v580
    %v754 = vunpack.c.h.b16 %v580
    %v755 = vunpack.c.l.b16 %v581
    %v756 = vunpack.c.h.b16 %v581
    %v757 = vunpack.c.l.b16 %v582
    %v758 = vunpack.c.h.b16 %v582
    %v759 = vunpack.c.l.b16 %v583
    %v760 = vunpack.c.h.b16 %v583
    %v761 = vunpack.c.l.b16 %v584
    %v762 = vunpack.c.h.b16 %v584
    %v763 = vunpack.c.l.b16 %v585
    %v764 = vunpack.c.h.b16 %v585
    %v765 = vunpack.c.l.b16 %v586
    %v766 = vunpack.c.h.b16 %v586
    %v767 = vpack.c.b16 %v719, %v703
    %v768 = vpack.c.b16 %v720, %v704
    %v769 = vpack.c.b16 %v721, %v705
    %v770 = vpack.c.b16 %v722, %v706
    %v771 = vpack.c.b16 %v723, %v707
    %v772 = vpack.c.b16 %v724, %v708
    %v773 = vpack.c.b16 %v725, %v709
    %v774 = vpack.c.b16 %v726, %v710
    %v775 = vpack.c.b16 %v727, %v711
    %v776 = vpack.c.b16 %v728, %v712
    %v777 = vpack.c.b16 %v729, %v713
    %v778 = vpack.c.b16 %v730, %v714
    %v779 = vpack.c.b16 %v731, %v715
    %v780 = vpack.c.b16 %v732, %v716
    %v781 = vpack.c.b16 %v733, %v717
    %v782 = vpack.c.b16 %v734, %v718
    %v783 = vpack.c.b16 %v751, %v735
    %v784 = vpack.c.b16 %v752, %v736
    %v785 = vpack.c.b16 %v753, %v737
    %v786 = vpack.c.b16 %v754, %v738
    %v787 = vpack.c.b16 %v755, %v739
    %v788 = vpack.c.b16 %v756, %v740
    %v789 = vpack.c.b16 %v757, %v741
    %v790 = vpack.c.b16 %v758, %v742
    %v791 = vpack.c.b16 %v759, %v743
    %v792 = vpack.c.b16 %v760, %v744
    %v793 = vpack.c.b16 %v761, %v745
    %v794 = vpack.c.b16 %v762, %v746
    %v795 = vpack.c.b16 %v763, %v747
    %v796 = vpack.c.b16 %v764, %v748
    %v797 = vpack.c.b16 %v765, %v749
    %v798 = vpack.c.b16 %v766, %v750
    %v832 = vsel %vm199, %v554, 0
    %834 = vmatprep.subr.bf16.mxu0 %v768
    %835 = vmatpush1.bf16.msra.mxu0 %v767
    %836 = vmatprep.subr.bf16.mxu0 %v784
    %837 = vmatpush1.bf16.msra.mxu0 %v783
    %838 = vmatprep.subr.bf16.mxu0 0
    %839 = vmatpush1.bf16.msra.mxu0 0
    %840 = vmatprep.subr.bf16.mxu0 0
    %841 = vmatpush1.bf16.msra.mxu0 0
    %842 = vmatprep.subr.bf16.mxu0 0
    %843 = vmatpush1.bf16.msra.mxu0 0
    %844 = vmatprep.subr.bf16.mxu0 0
    %845 = vmatpush1.bf16.msra.mxu0 0
    %846 = vmatprep.subr.bf16.mxu0 0
    %847 = vmatpush1.bf16.msra.mxu0 0
    %848 = vmatprep.subr.bf16.mxu0 0
    %849 = vmatpush1.bf16.msra.mxu0 0
    %850 = vmatprep.subr.bf16.mxu0 0
    %851 = vmatpush1.bf16.msra.mxu0 0
    %852 = vmatprep.subr.bf16.mxu0 0
    %853 = vmatpush1.bf16.msra.mxu0 0
    %854 = vmatprep.subr.bf16.mxu0 0
    %855 = vmatpush1.bf16.msra.mxu0 0
    %856 = vmatprep.subr.bf16.mxu0 0
    %857 = vmatpush1.bf16.msra.mxu0 0
    %858 = vmatprep.subr.bf16.mxu0 0
    %859 = vmatpush1.bf16.msra.mxu0 0
    %860 = vmatprep.subr.bf16.mxu0 0
    %861 = vmatpush1.bf16.msra.mxu0 0
    %862 = vmatprep.subr.bf16.mxu0 0
    %863 = vmatpush1.bf16.msra.mxu0 0
    %864 = vmatprep.subr.bf16.mxu0 0
    %865 = vmatpush1.bf16.msra.mxu0 0
    %866 = vmatprep.mubr.bf16.mxu0 0
    %867 = vmatmul.mubr.bf16.gmra.mrb[0].mxu0 %v832
    %v868 = vpop.f32.mrb[0].mxu0
    %v869 = vadd.f32 %v594, %v868
    %v870 = vpop.f32.mrb[0].mxu0
    %v871 = vadd.f32 %v598, %v870
    %v872 = vpop.f32.mrb[0].mxu0
    %v873 = vpop.f32.mrb[0].mxu0
    %874 = vdwg.mxu0
    %875 = vmatprep.subr.bf16.mxu0 %v770
    %876 = vmatpush1.bf16.msra.mxu0 %v769
    %877 = vmatprep.subr.bf16.mxu0 %v786
    %878 = vmatpush1.bf16.msra.mxu0 %v785
    %879 = vmatprep.subr.bf16.mxu0 0
    %880 = vmatpush1.bf16.msra.mxu0 0
    %881 = vmatprep.subr.bf16.mxu0 0
    %882 = vmatpush1.bf16.msra.mxu0 0
    %883 = vmatprep.subr.bf16.mxu0 0
    %884 = vmatpush1.bf16.msra.mxu0 0
    %885 = vmatprep.subr.bf16.mxu0 0
    %886 = vmatpush1.bf16.msra.mxu0 0
    %887 = vmatprep.subr.bf16.mxu0 0
    %888 = vmatpush1.bf16.msra.mxu0 0
    %889 = vmatprep.subr.bf16.mxu0 0
    %890 = vmatpush1.bf16.msra.mxu0 0
    %891 = vmatprep.subr.bf16.mxu0 0
    %892 = vmatpush1.bf16.msra.mxu0 0
    %893 = vmatprep.subr.bf16.mxu0 0
    %894 = vmatpush1.bf16.msra.mxu0 0
    %895 = vmatprep.subr.bf16.mxu0 0
    %896 = vmatpush1.bf16.msra.mxu0 0
    %897 = vmatprep.subr.bf16.mxu0 0
    %898 = vmatpush1.bf16.msra.mxu0 0
    %899 = vmatprep.subr.bf16.mxu0 0
    %900 = vmatpush1.bf16.msra.mxu0 0
    %901 = vmatprep.subr.bf16.mxu0 0
    %902 = vmatpush1.bf16.msra.mxu0 0
    %903 = vmatprep.subr.bf16.mxu0 0
    %904 = vmatpush1.bf16.msra.mxu0 0
    %905 = vmatprep.subr.bf16.mxu0 0
    %906 = vmatpush1.bf16.msra.mxu0 0
    %907 = vmatprep.mubr.bf16.mxu0 0
    %908 = vmatmul.mubr.bf16.gmra.mrb[0].mxu0 %v832
    %v909 = vpop.f32.mrb[0].mxu0
    %v910 = vadd.f32 %v602, %v909
    %v911 = vpop.f32.mrb[0].mxu0
    %v912 = vadd.f32 %v606, %v911
    %v913 = vpop.f32.mrb[0].mxu0
    %v914 = vpop.f32.mrb[0].mxu0
    %915 = vdwg.mxu0
    %916 = vmatprep.subr.bf16.mxu0 %v772
    %917 = vmatpush1.bf16.msra.mxu0 %v771
    %918 = vmatprep.subr.bf16.mxu0 %v788
    %919 = vmatpush1.bf16.msra.mxu0 %v787
    %920 = vmatprep.subr.bf16.mxu0 0
    %921 = vmatpush1.bf16.msra.mxu0 0
    %922 = vmatprep.subr.bf16.mxu0 0
    %923 = vmatpush1.bf16.msra.mxu0 0
    %924 = vmatprep.subr.bf16.mxu0 0
    %925 = vmatpush1.bf16.msra.mxu0 0
    %926 = vmatprep.subr.bf16.mxu0 0
    %927 = vmatpush1.bf16.msra.mxu0 0
    %928 = vmatprep.subr.bf16.mxu0 0
    %929 = vmatpush1.bf16.msra.mxu0 0
    %930 = vmatprep.subr.bf16.mxu0 0
    %931 = vmatpush1.bf16.msra.mxu0 0
    %932 = vmatprep.subr.bf16.mxu0 0
    %933 = vmatpush1.bf16.msra.mxu0 0
    %934 = vmatprep.subr.bf16.mxu0 0
    %935 = vmatpush1.bf16.msra.mxu0 0
    %936 = vmatprep.subr.bf16.mxu0 0
    %937 = vmatpush1.bf16.msra.mxu0 0
    %938 = vmatprep.subr.bf16.mxu0 0
    %939 = vmatpush1.bf16.msra.mxu0 0
    %940 = vmatprep.subr.bf16.mxu0 0
    %941 = vmatpush1.bf16.msra.mxu0 0
    %942 = vmatprep.subr.bf16.mxu0 0
    %943 = vmatpush1.bf16.msra.mxu0 0
    %944 = vmatprep.subr.bf16.mxu0 0
    %945 = vmatpush1.bf16.msra.mxu0 0
    %946 = vmatprep.subr.bf16.mxu0 0
    %947 = vmatpush1.bf16.msra.mxu0 0
    %948 = vmatprep.mubr.bf16.mxu0 0
    %949 = vmatmul.mubr.bf16.gmra.mrb[0].mxu0 %v832
    %v950 = vpop.f32.mrb[0].mxu0
    %v951 = vadd.f32 %v610, %v950
    %v952 = vpop.f32.mrb[0].mxu0
    %v953 = vadd.f32 %v614, %v952
    %v954 = vpop.f32.mrb[0].mxu0
    %v955 = vpop.f32.mrb[0].mxu0
    %956 = vdwg.mxu0
    %957 = vmatprep.subr.bf16.mxu0 %v774
    %958 = vmatpush1.bf16.msra.mxu0 %v773
    %959 = vmatprep.subr.bf16.mxu0 %v790
    %960 = vmatpush1.bf16.msra.mxu0 %v789
    %961 = vmatprep.subr.bf16.mxu0 0
    %962 = vmatpush1.bf16.msra.mxu0 0
    %963 = vmatprep.subr.bf16.mxu0 0
    %964 = vmatpush1.bf16.msra.mxu0 0
    %965 = vmatprep.subr.bf16.mxu0 0
    %966 = vmatpush1.bf16.msra.mxu0 0
    %967 = vmatprep.subr.bf16.mxu0 0
    %968 = vmatpush1.bf16.msra.mxu0 0
    %969 = vmatprep.subr.bf16.mxu0 0
    %970 = vmatpush1.bf16.msra.mxu0 0
    %971 = vmatprep.subr.bf16.mxu0 0
    %972 = vmatpush1.bf16.msra.mxu0 0
    %973 = vmatprep.subr.bf16.mxu0 0
    %974 = vmatpush1.bf16.msra.mxu0 0
    %975 = vmatprep.subr.bf16.mxu0 0
    %976 = vmatpush1.bf16.msra.mxu0 0
    %977 = vmatprep.subr.bf16.mxu0 0
    %978 = vmatpush1.bf16.msra.mxu0 0
    %979 = vmatprep.subr.bf16.mxu0 0
    %980 = vmatpush1.bf16.msra.mxu0 0
    %981 = vmatprep.subr.bf16.mxu0 0
    %982 = vmatpush1.bf16.msra.mxu0 0
    %983 = vmatprep.subr.bf16.mxu0 0
    %984 = vmatpush1.bf16.msra.mxu0 0
    %985 = vmatprep.subr.bf16.mxu0 0
    %986 = vmatpush1.bf16.msra.mxu0 0
    %987 = vmatprep.subr.bf16.mxu0 0
    %988 = vmatpush1.bf16.msra.mxu0 0
    %989 = vmatprep.mubr.bf16.mxu0 0
    %990 = vmatmul.mubr.bf16.gmra.mrb[0].mxu0 %v832
    %v991 = vpop.f32.mrb[0].mxu0
    %v992 = vadd.f32 %v618, %v991
    %v993 = vpop.f32.mrb[0].mxu0
    %v994 = vadd.f32 %v622, %v993
    %v995 = vpop.f32.mrb[0].mxu0
    %v996 = vpop.f32.mrb[0].mxu0
    %997 = vdwg.mxu0
    %998 = vmatprep.subr.bf16.mxu0 %v776
    %999 = vmatpush1.bf16.msra.mxu0 %v775
    %1000 = vmatprep.subr.bf16.mxu0 %v792
    %1001 = vmatpush1.bf16.msra.mxu0 %v791
    %1002 = vmatprep.subr.bf16.mxu0 0
    %1003 = vmatpush1.bf16.msra.mxu0 0
    %1004 = vmatprep.subr.bf16.mxu0 0
    %1005 = vmatpush1.bf16.msra.mxu0 0
    %1006 = vmatprep.subr.bf16.mxu0 0
    %1007 = vmatpush1.bf16.msra.mxu0 0
    %1008 = vmatprep.subr.bf16.mxu0 0
    %1009 = vmatpush1.bf16.msra.mxu0 0
    %1010 = vmatprep.subr.bf16.mxu0 0
    %1011 = vmatpush1.bf16.msra.mxu0 0
    %1012 = vmatprep.subr.bf16.mxu0 0
    %1013 = vmatpush1.bf16.msra.mxu0 0
    %1014 = vmatprep.subr.bf16.mxu0 0
    %1015 = vmatpush1.bf16.msra.mxu0 0
    %1016 = vmatprep.subr.bf16.mxu0 0
    %1017 = vmatpush1.bf16.msra.mxu0 0
    %1018 = vmatprep.subr.bf16.mxu0 0
    %1019 = vmatpush1.bf16.msra.mxu0 0
    %1020 = vmatprep.subr.bf16.mxu0 0
    %1021 = vmatpush1.bf16.msra.mxu0 0
    %1022 = vmatprep.subr.bf16.mxu0 0
    %1023 = vmatpush1.bf16.msra.mxu0 0
    %1024 = vmatprep.subr.bf16.mxu0 0
    %1025 = vmatpush1.bf16.msra.mxu0 0
    %1026 = vmatprep.subr.bf16.mxu0 0
    %1027 = vmatpush1.bf16.msra.mxu0 0
    %1028 = vmatprep.subr.bf16.mxu0 0
    %1029 = vmatpush1.bf16.msra.mxu0 0
    %1030 = vmatprep.mubr.bf16.mxu0 0
    %1031 = vmatmul.mubr.bf16.gmra.mrb[0].mxu0 %v832
    %v1032 = vpop.f32.mrb[0].mxu0
    %v1033 = vadd.f32 %v626, %v1032
    %v1034 = vpop.f32.mrb[0].mxu0
    %v1035 = vadd.f32 %v630, %v1034
    %v1036 = vpop.f32.mrb[0].mxu0
    %v1037 = vpop.f32.mrb[0].mxu0
    %1038 = vdwg.mxu0
    %1039 = vmatprep.subr.bf16.mxu0 %v778
    %1040 = vmatpush1.bf16.msra.mxu0 %v777
    %1041 = vmatprep.subr.bf16.mxu0 %v794
    %1042 = vmatpush1.bf16.msra.mxu0 %v793
    %1043 = vmatprep.subr.bf16.mxu0 0
    %1044 = vmatpush1.bf16.msra.mxu0 0
    %1045 = vmatprep.subr.bf16.mxu0 0
    %1046 = vmatpush1.bf16.msra.mxu0 0
    %1047 = vmatprep.subr.bf16.mxu0 0
    %1048 = vmatpush1.bf16.msra.mxu0 0
    %1049 = vmatprep.subr.bf16.mxu0 0
    %1050 = vmatpush1.bf16.msra.mxu0 0
    %1051 = vmatprep.subr.bf16.mxu0 0
    %1052 = vmatpush1.bf16.msra.mxu0 0
    %1053 = vmatprep.subr.bf16.mxu0 0
    %1054 = vmatpush1.bf16.msra.mxu0 0
    %1055 = vmatprep.subr.bf16.mxu0 0
    %1056 = vmatpush1.bf16.msra.mxu0 0
    %1057 = vmatprep.subr.bf16.mxu0 0
    %1058 = vmatpush1.bf16.msra.mxu0 0
    %1059 = vmatprep.subr.bf16.mxu0 0
    %1060 = vmatpush1.bf16.msra.mxu0 0
    %1061 = vmatprep.subr.bf16.mxu0 0
    %1062 = vmatpush1.bf16.msra.mxu0 0
    %1063 = vmatprep.subr.bf16.mxu0 0
    %1064 = vmatpush1.bf16.msra.mxu0 0
    %1065 = vmatprep.subr.bf16.mxu0 0
    %1066 = vmatpush1.bf16.msra.mxu0 0
    %1067 = vmatprep.subr.bf16.mxu0 0
    %1068 = vmatpush1.bf16.msra.mxu0 0
    %1069 = vmatprep.subr.bf16.mxu0 0
    %1070 = vmatpush1.bf16.msra.mxu0 0
    %1071 = vmatprep.mubr.bf16.mxu0 0
    %1072 = vmatmul.mubr.bf16.gmra.mrb[0].mxu0 %v832
    %v1073 = vpop.f32.mrb[0].mxu0
    %v1074 = vadd.f32 %v634, %v1073
    %v1075 = vpop.f32.mrb[0].mxu0
    %v1076 = vadd.f32 %v638, %v1075
    %v1077 = vpop.f32.mrb[0].mxu0
    %v1078 = vpop.f32.mrb[0].mxu0
    %1079 = vdwg.mxu0
    %1080 = vmatprep.subr.bf16.mxu0 %v780
    %1081 = vmatpush1.bf16.msra.mxu0 %v779
    %1082 = vmatprep.subr.bf16.mxu0 %v796
    %1083 = vmatpush1.bf16.msra.mxu0 %v795
    %1084 = vmatprep.subr.bf16.mxu0 0
    %1085 = vmatpush1.bf16.msra.mxu0 0
    %1086 = vmatprep.subr.bf16.mxu0 0
    %1087 = vmatpush1.bf16.msra.mxu0 0
    %1088 = vmatprep.subr.bf16.mxu0 0
    %1089 = vmatpush1.bf16.msra.mxu0 0
    %1090 = vmatprep.subr.bf16.mxu0 0
    %1091 = vmatpush1.bf16.msra.mxu0 0
    %1092 = vmatprep.subr.bf16.mxu0 0
    %1093 = vmatpush1.bf16.msra.mxu0 0
    %1094 = vmatprep.subr.bf16.mxu0 0
    %1095 = vmatpush1.bf16.msra.mxu0 0
    %1096 = vmatprep.subr.bf16.mxu0 0
    %1097 = vmatpush1.bf16.msra.mxu0 0
    %1098 = vmatprep.subr.bf16.mxu0 0
    %1099 = vmatpush1.bf16.msra.mxu0 0
    %1100 = vmatprep.subr.bf16.mxu0 0
    %1101 = vmatpush1.bf16.msra.mxu0 0
    %1102 = vmatprep.subr.bf16.mxu0 0
    %1103 = vmatpush1.bf16.msra.mxu0 0
    %1104 = vmatprep.subr.bf16.mxu0 0
    %1105 = vmatpush1.bf16.msra.mxu0 0
    %1106 = vmatprep.subr.bf16.mxu0 0
    %1107 = vmatpush1.bf16.msra.mxu0 0
    %1108 = vmatprep.subr.bf16.mxu0 0
    %1109 = vmatpush1.bf16.msra.mxu0 0
    %1110 = vmatprep.subr.bf16.mxu0 0
    %1111 = vmatpush1.bf16.msra.mxu0 0
    %1112 = vmatprep.mubr.bf16.mxu0 0
    %1113 = vmatmul.mubr.bf16.gmra.mrb[0].mxu0 %v832
    %v1114 = vpop.f32.mrb[0].mxu0
    %v1115 = vadd.f32 %v642, %v1114
    %v1116 = vpop.f32.mrb[0].mxu0
    %v1117 = vadd.f32 %v646, %v1116
    %v1118 = vpop.f32.mrb[0].mxu0
    %v1119 = vpop.f32.mrb[0].mxu0
    %1120 = vdwg.mxu0
    %1121 = vmatprep.subr.bf16.mxu0 %v782
    %1122 = vmatpush1.bf16.msra.mxu0 %v781
    %1123 = vmatprep.subr.bf16.mxu0 %v798
    %1124 = vmatpush1.bf16.msra.mxu0 %v797
    %1125 = vmatprep.subr.bf16.mxu0 0
    %1126 = vmatpush1.bf16.msra.mxu0 0
    %1127 = vmatprep.subr.bf16.mxu0 0
    %1128 = vmatpush1.bf16.msra.mxu0 0
    %1129 = vmatprep.subr.bf16.mxu0 0
    %1130 = vmatpush1.bf16.msra.mxu0 0
    %1131 = vmatprep.subr.bf16.mxu0 0
    %1132 = vmatpush1.bf16.msra.mxu0 0
    %1133 = vmatprep.subr.bf16.mxu0 0
    %1134 = vmatpush1.bf16.msra.mxu0 0
    %1135 = vmatprep.subr.bf16.mxu0 0
    %1136 = vmatpush1.bf16.msra.mxu0 0
    %1137 = vmatprep.subr.bf16.mxu0 0
    %1138 = vmatpush1.bf16.msra.mxu0 0
    %1139 = vmatprep.subr.bf16.mxu0 0
    %1140 = vmatpush1.bf16.msra.mxu0 0
    %1141 = vmatprep.subr.bf16.mxu0 0
    %1142 = vmatpush1.bf16.msra.mxu0 0
    %1143 = vmatprep.subr.bf16.mxu0 0
    %1144 = vmatpush1.bf16.msra.mxu0 0
    %1145 = vmatprep.subr.bf16.mxu0 0
    %1146 = vmatpush1.bf16.msra.mxu0 0
    %1147 = vmatprep.subr.bf16.mxu0 0
    %1148 = vmatpush1.bf16.msra.mxu0 0
    %1149 = vmatprep.subr.bf16.mxu0 0
    %1150 = vmatpush1.bf16.msra.mxu0 0
    %1151 = vmatprep.subr.bf16.mxu0 0
    %1152 = vmatpush1.bf16.msra.mxu0 0
    %1153 = vmatprep.mubr.bf16.mxu0 0
    %1154 = vmatmul.mubr.bf16.gmra.mrb[0].mxu0 %v832
    %v1155 = vpop.f32.mrb[0].mxu0
    %v1156 = vadd.f32 %v650, %v1155
    %v1157 = vpop.f32.mrb[0].mxu0
    %v1158 = vadd.f32 %v654, %v1157
    %v1159 = vpop.f32.mrb[0].mxu0
    %v1160 = vpop.f32.mrb[0].mxu0
    %1161 = vdwg.mxu0
    %v1162 = vmax.f32 %v869, 0.0
    %v1163 = vmax.f32 %v871, 0.0
    %v1164 = vmax.f32 %v910, 0.0
    %v1165 = vmax.f32 %v912, 0.0
    %v1166 = vmax.f32 %v951, 0.0
    %v1167 = vmax.f32 %v953, 0.0
    %v1168 = vmax.f32 %v992, 0.0
    %v1169 = vmax.f32 %v994, 0.0
    %v1170 = vmax.f32 %v1033, 0.0
    %v1171 = vmax.f32 %v1035, 0.0
    %v1172 = vmax.f32 %v1074, 0.0
    %v1173 = vmax.f32 %v1076, 0.0
    %v1174 = vmax.f32 %v1115, 0.0
    %v1175 = vmax.f32 %v1117, 0.0
    %v1176 = vmax.f32 %v1156, 0.0
    %v1177 = vmax.f32 %v1158, 0.0
    %v1178 = vpack.c.bf16 %v1162, %v1162
    %v1179 = vpack.c.bf16 %v1163, %v1163
    %v1180 = vpack.c.bf16 %v1164, %v1164
    %v1181 = vpack.c.bf16 %v1165, %v1165
    %v1182 = vpack.c.bf16 %v1166, %v1166
    %v1183 = vpack.c.bf16 %v1167, %v1167
    %v1184 = vpack.c.bf16 %v1168, %v1168
    %v1185 = vpack.c.bf16 %v1169, %v1169
    %v1186 = vpack.c.bf16 %v1170, %v1170
    %v1187 = vpack.c.bf16 %v1171, %v1171
    %v1188 = vpack.c.bf16 %v1172, %v1172
    %v1189 = vpack.c.bf16 %v1173, %v1173
    %v1190 = vpack.c.bf16 %v1174, %v1174
    %v1191 = vpack.c.bf16 %v1175, %v1175
    %v1192 = vpack.c.bf16 %v1176, %v1176
    %v1193 = vpack.c.bf16 %v1177, %v1177
    %v1194 = vld [vmem:[#allocation14] sm:$0xff]
    %v1195 = vld [vmem:[#allocation14 + $0x8] sm:$0xff]
    %v1196 = vld [vmem:[#allocation14 + $0x10] sm:$0xff]
    %v1197 = vld [vmem:[#allocation14 + $0x18] sm:$0xff]
    %v1198 = vld [vmem:[#allocation14 + $0x20] sm:$0xff]
    %v1199 = vld [vmem:[#allocation14 + $0x28] sm:$0xff]
    %v1200 = vld [vmem:[#allocation14 + $0x30] sm:$0xff]
    %v1201 = vld [vmem:[#allocation14 + $0x38] sm:$0xff]
    %v1202 = vld [vmem:[#allocation14 + $0x40] sm:$0xff]
    %v1203 = vld [vmem:[#allocation14 + $0x48] sm:$0xff]
    %v1204 = vld [vmem:[#allocation14 + $0x50] sm:$0xff]
    %v1205 = vld [vmem:[#allocation14 + $0x58] sm:$0xff]
    %v1206 = vld [vmem:[#allocation14 + $0x60] sm:$0xff]
    %v1207 = vld [vmem:[#allocation14 + $0x68] sm:$0xff]
    %v1208 = vld [vmem:[#allocation14 + $0x70] sm:$0xff]
    %v1209 = vld [vmem:[#allocation14 + $0x78] sm:$0xff]
    %v1210 = vld [vmem:[#allocation14 + $0x80] sm:$0xff]
    %v1211 = vld [vmem:[#allocation14 + $0x88] sm:$0xff]
    %v1212 = vld [vmem:[#allocation14 + $0x90] sm:$0xff]
    %v1213 = vld [vmem:[#allocation14 + $0x98] sm:$0xff]
    %v1214 = vld [vmem:[#allocation14 + $0xa0] sm:$0xff]
    %v1215 = vld [vmem:[#allocation14 + $0xa8] sm:$0xff]
    %v1216 = vld [vmem:[#allocation14 + $0xb0] sm:$0xff]
    %v1217 = vld [vmem:[#allocation14 + $0xb8] sm:$0xff]
    %v1218 = vld [vmem:[#allocation14 + $0xc0] sm:$0xff]
    %v1219 = vld [vmem:[#allocation14 + $0xc8] sm:$0xff]
    %v1220 = vld [vmem:[#allocation14 + $0xd0] sm:$0xff]
    %v1221 = vld [vmem:[#allocation14 + $0xd8] sm:$0xff]
    %v1222 = vld [vmem:[#allocation14 + $0xe0] sm:$0xff]
    %v1223 = vld [vmem:[#allocation14 + $0xe8] sm:$0xff]
    %v1224 = vld [vmem:[#allocation14 + $0xf0] sm:$0xff]
    %v1225 = vld [vmem:[#allocation14 + $0xf8] sm:$0xff]
    %v1226 = vld [vmem:[#allocation16] sm:$0x1]
    %v1228 = vlaneseq
    %v1229 = vshrl.u32 %v1228, 7
    %v1230 = vsub.s32 0, %v1229
    %v1231 = vrot.slane %v1226, %v1230
    %v1265 = vunpack.c.l.b16 %v1194
    %v1266 = vunpack.c.h.b16 %v1194
    %v1267 = vunpack.c.l.b16 %v1195
    %v1268 = vunpack.c.h.b16 %v1195
    %v1269 = vunpack.c.l.b16 %v1196
    %v1270 = vunpack.c.h.b16 %v1196
    %v1271 = vunpack.c.l.b16 %v1197
    %v1272 = vunpack.c.h.b16 %v1197
    %v1273 = vunpack.c.l.b16 %v1198
    %v1274 = vunpack.c.h.b16 %v1198
    %v1275 = vunpack.c.l.b16 %v1199
    %v1276 = vunpack.c.h.b16 %v1199
    %v1277 = vunpack.c.l.b16 %v1200
    %v1278 = vunpack.c.h.b16 %v1200
    %v1279 = vunpack.c.l.b16 %v1201
    %v1280 = vunpack.c.h.b16 %v1201
    %v1281 = vunpack.c.l.b16 %v1202
    %v1282 = vunpack.c.h.b16 %v1202
    %v1283 = vunpack.c.l.b16 %v1203
    %v1284 = vunpack.c.h.b16 %v1203
    %v1285 = vunpack.c.l.b16 %v1204
    %v1286 = vunpack.c.h.b16 %v1204
    %v1287 = vunpack.c.l.b16 %v1205
    %v1288 = vunpack.c.h.b16 %v1205
    %v1289 = vunpack.c.l.b16 %v1206
    %v1290 = vunpack.c.h.b16 %v1206
    %v1291 = vunpack.c.l.b16 %v1207
    %v1292 = vunpack.c.h.b16 %v1207
    %v1293 = vunpack.c.l.b16 %v1208
    %v1294 = vunpack.c.h.b16 %v1208
    %v1295 = vunpack.c.l.b16 %v1209
    %v1296 = vunpack.c.h.b16 %v1209
    %v1297 = vunpack.c.l.b16 %v1210
    %v1298 = vunpack.c.h.b16 %v1210
    %v1299 = vunpack.c.l.b16 %v1211
    %v1300 = vunpack.c.h.b16 %v1211
    %v1301 = vunpack.c.l.b16 %v1212
    %v1302 = vunpack.c.h.b16 %v1212
    %v1303 = vunpack.c.l.b16 %v1213
    %v1304 = vunpack.c.h.b16 %v1213
    %v1305 = vunpack.c.l.b16 %v1214
    %v1306 = vunpack.c.h.b16 %v1214
    %v1307 = vunpack.c.l.b16 %v1215
    %v1308 = vunpack.c.h.b16 %v1215
    %v1309 = vunpack.c.l.b16 %v1216
    %v1310 = vunpack.c.h.b16 %v1216
    %v1311 = vunpack.c.l.b16 %v1217
    %v1312 = vunpack.c.h.b16 %v1217
    %v1313 = vunpack.c.l.b16 %v1218
    %v1314 = vunpack.c.h.b16 %v1218
    %v1315 = vunpack.c.l.b16 %v1219
    %v1316 = vunpack.c.h.b16 %v1219
    %v1317 = vunpack.c.l.b16 %v1220
    %v1318 = vunpack.c.h.b16 %v1220
    %v1319 = vunpack.c.l.b16 %v1221
    %v1320 = vunpack.c.h.b16 %v1221
    %v1321 = vunpack.c.l.b16 %v1222
    %v1322 = vunpack.c.h.b16 %v1222
    %v1323 = vunpack.c.l.b16 %v1223
    %v1324 = vunpack.c.h.b16 %v1223
    %v1325 = vunpack.c.l.b16 %v1224
    %v1326 = vunpack.c.h.b16 %v1224
    %v1327 = vunpack.c.l.b16 %v1225
    %v1328 = vunpack.c.h.b16 %v1225
    %v1329 = vpack.c.b16 %v1281, %v1265
    %v1330 = vpack.c.b16 %v1282, %v1266
    %v1331 = vpack.c.b16 %v1283, %v1267
    %v1332 = vpack.c.b16 %v1284, %v1268
    %v1333 = vpack.c.b16 %v1285, %v1269
    %v1334 = vpack.c.b16 %v1286, %v1270
    %v1335 = vpack.c.b16 %v1287, %v1271
    %v1336 = vpack.c.b16 %v1288, %v1272
    %v1337 = vpack.c.b16 %v1289, %v1273
    %v1338 = vpack.c.b16 %v1290, %v1274
    %v1339 = vpack.c.b16 %v1291, %v1275
    %v1340 = vpack.c.b16 %v1292, %v1276
    %v1341 = vpack.c.b16 %v1293, %v1277
    %v1342 = vpack.c.b16 %v1294, %v1278
    %v1343 = vpack.c.b16 %v1295, %v1279
    %v1344 = vpack.c.b16 %v1296, %v1280
    %v1345 = vpack.c.b16 %v1313, %v1297
    %v1346 = vpack.c.b16 %v1314, %v1298
    %v1347 = vpack.c.b16 %v1315, %v1299
    %v1348 = vpack.c.b16 %v1316, %v1300
    %v1349 = vpack.c.b16 %v1317, %v1301
    %v1350 = vpack.c.b16 %v1318, %v1302
    %v1351 = vpack.c.b16 %v1319, %v1303
    %v1352 = vpack.c.b16 %v1320, %v1304
    %v1353 = vpack.c.b16 %v1321, %v1305
    %v1354 = vpack.c.b16 %v1322, %v1306
    %v1355 = vpack.c.b16 %v1323, %v1307
    %v1356 = vpack.c.b16 %v1324, %v1308
    %v1357 = vpack.c.b16 %v1325, %v1309
    %v1358 = vpack.c.b16 %v1326, %v1310
    %v1359 = vpack.c.b16 %v1327, %v1311
    %v1360 = vpack.c.b16 %v1328, %v1312
    %1393 = vmatprep.subr.bf16.mxu0 %v1330
    %1394 = vmatpush1.bf16.xpose.msra.mxu0 %v1329
    %1395 = vmatprep.subr.bf16.mxu0 %v1346
    %1396 = vmatpush1.bf16.xpose.msra.mxu0 %v1345
    %1397 = vmatprep.subr.bf16.mxu0 0
    %1398 = vmatpush1.bf16.xpose.msra.mxu0 0
    %1399 = vmatprep.subr.bf16.mxu0 0
    %1400 = vmatpush1.bf16.xpose.msra.mxu0 0
    %1401 = vmatprep.subr.bf16.mxu0 0
    %1402 = vmatpush1.bf16.xpose.msra.mxu0 0
    %1403 = vmatprep.subr.bf16.mxu0 0
    %1404 = vmatpush1.bf16.xpose.msra.mxu0 0
    %1405 = vmatprep.subr.bf16.mxu0 0
    %1406 = vmatpush1.bf16.xpose.msra.mxu0 0
    %1407 = vmatprep.subr.bf16.mxu0 0
    %1408 = vmatpush1.bf16.xpose.msra.mxu0 0
    %1409 = vmatprep.subr.bf16.mxu0 0
    %1410 = vmatpush1.bf16.xpose.msra.mxu0 0
    %1411 = vmatprep.subr.bf16.mxu0 0
    %1412 = vmatpush1.bf16.xpose.msra.mxu0 0
    %1413 = vmatprep.subr.bf16.mxu0 0
    %1414 = vmatpush1.bf16.xpose.msra.mxu0 0
    %1415 = vmatprep.subr.bf16.mxu0 0
    %1416 = vmatpush1.bf16.xpose.msra.mxu0 0
    %1417 = vmatprep.subr.bf16.mxu0 0
    %1418 = vmatpush1.bf16.xpose.msra.mxu0 0
    %1419 = vmatprep.subr.bf16.mxu0 0
    %1420 = vmatpush1.bf16.xpose.msra.mxu0 0
    %1421 = vmatprep.subr.bf16.mxu0 0
    %1422 = vmatpush1.bf16.xpose.msra.mxu0 0
    %1423 = vmatprep.subr.bf16.mxu0 0
    %1424 = vmatpush1.bf16.xpose.msra.mxu0 0
    %1425 = vmatprep.mubr.bf16.mxu0 %v1179
    %1426 = vmatmul.mubr.bf16.gmra.mrb[0].mxu0 %v1178
    %v1427 = vpop.f32.mrb[0].mxu0
    %v1428 = vadd.f32 %v1231, %v1427
    %v1429 = vpop.f32.mrb[0].mxu0
    %v1430 = vpop.f32.mrb[0].mxu0
    %v1431 = vpop.f32.mrb[0].mxu0
    %1432 = vdwg.mxu0
    %1433 = vmatprep.subr.bf16.mxu0 %v1332
    %1434 = vmatpush1.bf16.xpose.msra.mxu0 %v1331
    %1435 = vmatprep.subr.bf16.mxu0 %v1348
    %1436 = vmatpush1.bf16.xpose.msra.mxu0 %v1347
    %1437 = vmatprep.subr.bf16.mxu0 0
    %1438 = vmatpush1.bf16.xpose.msra.mxu0 0
    %1439 = vmatprep.subr.bf16.mxu0 0
    %1440 = vmatpush1.bf16.xpose.msra.mxu0 0
    %1441 = vmatprep.subr.bf16.mxu0 0
    %1442 = vmatpush1.bf16.xpose.msra.mxu0 0
    %1443 = vmatprep.subr.bf16.mxu0 0
    %1444 = vmatpush1.bf16.xpose.msra.mxu0 0
    %1445 = vmatprep.subr.bf16.mxu0 0
    %1446 = vmatpush1.bf16.xpose.msra.mxu0 0
    %1447 = vmatprep.subr.bf16.mxu0 0
    %1448 = vmatpush1.bf16.xpose.msra.mxu0 0
    %1449 = vmatprep.subr.bf16.mxu0 0
    %1450 = vmatpush1.bf16.xpose.msra.mxu0 0
    %1451 = vmatprep.subr.bf16.mxu0 0
    %1452 = vmatpush1.bf16.xpose.msra.mxu0 0
    %1453 = vmatprep.subr.bf16.mxu0 0
    %1454 = vmatpush1.bf16.xpose.msra.mxu0 0
    %1455 = vmatprep.subr.bf16.mxu0 0
    %1456 = vmatpush1.bf16.xpose.msra.mxu0 0
    %1457 = vmatprep.subr.bf16.mxu0 0
    %1458 = vmatpush1.bf16.xpose.msra.mxu0 0
    %1459 = vmatprep.subr.bf16.mxu0 0
    %1460 = vmatpush1.bf16.xpose.msra.mxu0 0
    %1461 = vmatprep.subr.bf16.mxu0 0
    %1462 = vmatpush1.bf16.xpose.msra.mxu0 0
    %1463 = vmatprep.subr.bf16.mxu0 0
    %1464 = vmatpush1.bf16.xpose.msra.mxu0 0
    %1465 = vmatprep.mubr.bf16.mxu0 %v1181
    %1466 = vmatmul.mubr.bf16.gmra.mrb[0].mxu0 %v1180
    %v1467 = vpop.f32.mrb[0].mxu0
    %v1468 = vadd.f32 %v1428, %v1467
    %v1469 = vpop.f32.mrb[0].mxu0
    %v1470 = vpop.f32.mrb[0].mxu0
    %v1471 = vpop.f32.mrb[0].mxu0
    %1472 = vdwg.mxu0
    %1473 = vmatprep.subr.bf16.mxu0 %v1334
    %1474 = vmatpush1.bf16.xpose.msra.mxu0 %v1333
    %1475 = vmatprep.subr.bf16.mxu0 %v1350
    %1476 = vmatpush1.bf16.xpose.msra.mxu0 %v1349
    %1477 = vmatprep.subr.bf16.mxu0 0
    %1478 = vmatpush1.bf16.xpose.msra.mxu0 0
    %1479 = vmatprep.subr.bf16.mxu0 0
    %1480 = vmatpush1.bf16.xpose.msra.mxu0 0
    %1481 = vmatprep.subr.bf16.mxu0 0
    %1482 = vmatpush1.bf16.xpose.msra.mxu0 0
    %1483 = vmatprep.subr.bf16.mxu0 0
    %1484 = vmatpush1.bf16.xpose.msra.mxu0 0
    %1485 = vmatprep.subr.bf16.mxu0 0
    %1486 = vmatpush1.bf16.xpose.msra.mxu0 0
    %1487 = vmatprep.subr.bf16.mxu0 0
    %1488 = vmatpush1.bf16.xpose.msra.mxu0 0
    %1489 = vmatprep.subr.bf16.mxu0 0
    %1490 = vmatpush1.bf16.xpose.msra.mxu0 0
    %1491 = vmatprep.subr.bf16.mxu0 0
    %1492 = vmatpush1.bf16.xpose.msra.mxu0 0
    %1493 = vmatprep.subr.bf16.mxu0 0
    %1494 = vmatpush1.bf16.xpose.msra.mxu0 0
    %1495 = vmatprep.subr.bf16.mxu0 0
    %1496 = vmatpush1.bf16.xpose.msra.mxu0 0
    %1497 = vmatprep.subr.bf16.mxu0 0
    %1498 = vmatpush1.bf16.xpose.msra.mxu0 0
    %1499 = vmatprep.subr.bf16.mxu0 0
    %1500 = vmatpush1.bf16.xpose.msra.mxu0 0
    %1501 = vmatprep.subr.bf16.mxu0 0
    %1502 = vmatpush1.bf16.xpose.msra.mxu0 0
    %1503 = vmatprep.subr.bf16.mxu0 0
    %1504 = vmatpush1.bf16.xpose.msra.mxu0 0
    %1505 = vmatprep.mubr.bf16.mxu0 %v1183
    %1506 = vmatmul.mubr.bf16.gmra.mrb[0].mxu0 %v1182
    %v1507 = vpop.f32.mrb[0].mxu0
    %v1508 = vadd.f32 %v1468, %v1507
    %v1509 = vpop.f32.mrb[0].mxu0
    %v1510 = vpop.f32.mrb[0].mxu0
    %v1511 = vpop.f32.mrb[0].mxu0
    %1512 = vdwg.mxu0
    %1513 = vmatprep.subr.bf16.mxu0 %v1336
    %1514 = vmatpush1.bf16.xpose.msra.mxu0 %v1335
    %1515 = vmatprep.subr.bf16.mxu0 %v1352
    %1516 = vmatpush1.bf16.xpose.msra.mxu0 %v1351
    %1517 = vmatprep.subr.bf16.mxu0 0
    %1518 = vmatpush1.bf16.xpose.msra.mxu0 0
    %1519 = vmatprep.subr.bf16.mxu0 0
    %1520 = vmatpush1.bf16.xpose.msra.mxu0 0
    %1521 = vmatprep.subr.bf16.mxu0 0
    %1522 = vmatpush1.bf16.xpose.msra.mxu0 0
    %1523 = vmatprep.subr.bf16.mxu0 0
    %1524 = vmatpush1.bf16.xpose.msra.mxu0 0
    %1525 = vmatprep.subr.bf16.mxu0 0
    %1526 = vmatpush1.bf16.xpose.msra.mxu0 0
    %1527 = vmatprep.subr.bf16.mxu0 0
    %1528 = vmatpush1.bf16.xpose.msra.mxu0 0
    %1529 = vmatprep.subr.bf16.mxu0 0
    %1530 = vmatpush1.bf16.xpose.msra.mxu0 0
    %1531 = vmatprep.subr.bf16.mxu0 0
    %1532 = vmatpush1.bf16.xpose.msra.mxu0 0
    %1533 = vmatprep.subr.bf16.mxu0 0
    %1534 = vmatpush1.bf16.xpose.msra.mxu0 0
    %1535 = vmatprep.subr.bf16.mxu0 0
    %1536 = vmatpush1.bf16.xpose.msra.mxu0 0
    %1537 = vmatprep.subr.bf16.mxu0 0
    %1538 = vmatpush1.bf16.xpose.msra.mxu0 0
    %1539 = vmatprep.subr.bf16.mxu0 0
    %1540 = vmatpush1.bf16.xpose.msra.mxu0 0
    %1541 = vmatprep.subr.bf16.mxu0 0
    %1542 = vmatpush1.bf16.xpose.msra.mxu0 0
    %1543 = vmatprep.subr.bf16.mxu0 0
    %1544 = vmatpush1.bf16.xpose.msra.mxu0 0
    %1545 = vmatprep.mubr.bf16.mxu0 %v1185
    %1546 = vmatmul.mubr.bf16.gmra.mrb[0].mxu0 %v1184
    %v1547 = vpop.f32.mrb[0].mxu0
    %v1548 = vadd.f32 %v1508, %v1547
    %v1549 = vpop.f32.mrb[0].mxu0
    %v1550 = vpop.f32.mrb[0].mxu0
    %v1551 = vpop.f32.mrb[0].mxu0
    %1552 = vdwg.mxu0
    %1553 = vmatprep.subr.bf16.mxu0 %v1338
    %1554 = vmatpush1.bf16.xpose.msra.mxu0 %v1337
    %1555 = vmatprep.subr.bf16.mxu0 %v1354
    %1556 = vmatpush1.bf16.xpose.msra.mxu0 %v1353
    %1557 = vmatprep.subr.bf16.mxu0 0
    %1558 = vmatpush1.bf16.xpose.msra.mxu0 0
    %1559 = vmatprep.subr.bf16.mxu0 0
    %1560 = vmatpush1.bf16.xpose.msra.mxu0 0
    %1561 = vmatprep.subr.bf16.mxu0 0
    %1562 = vmatpush1.bf16.xpose.msra.mxu0 0
    %1563 = vmatprep.subr.bf16.mxu0 0
    %1564 = vmatpush1.bf16.xpose.msra.mxu0 0
    %1565 = vmatprep.subr.bf16.mxu0 0
    %1566 = vmatpush1.bf16.xpose.msra.mxu0 0
    %1567 = vmatprep.subr.bf16.mxu0 0
    %1568 = vmatpush1.bf16.xpose.msra.mxu0 0
    %1569 = vmatprep.subr.bf16.mxu0 0
    %1570 = vmatpush1.bf16.xpose.msra.mxu0 0
    %1571 = vmatprep.subr.bf16.mxu0 0
    %1572 = vmatpush1.bf16.xpose.msra.mxu0 0
    %1573 = vmatprep.subr.bf16.mxu0 0
    %1574 = vmatpush1.bf16.xpose.msra.mxu0 0
    %1575 = vmatprep.subr.bf16.mxu0 0
    %1576 = vmatpush1.bf16.xpose.msra.mxu0 0
    %1577 = vmatprep.subr.bf16.mxu0 0
    %1578 = vmatpush1.bf16.xpose.msra.mxu0 0
    %1579 = vmatprep.subr.bf16.mxu0 0
    %1580 = vmatpush1.bf16.xpose.msra.mxu0 0
    %1581 = vmatprep.subr.bf16.mxu0 0
    %1582 = vmatpush1.bf16.xpose.msra.mxu0 0
    %1583 = vmatprep.subr.bf16.mxu0 0
    %1584 = vmatpush1.bf16.xpose.msra.mxu0 0
    %1585 = vmatprep.mubr.bf16.mxu0 %v1187
    %1586 = vmatmul.mubr.bf16.gmra.mrb[0].mxu0 %v1186
    %v1587 = vpop.f32.mrb[0].mxu0
    %v1588 = vadd.f32 %v1548, %v1587
    %v1589 = vpop.f32.mrb[0].mxu0
    %v1590 = vpop.f32.mrb[0].mxu0
    %v1591 = vpop.f32.mrb[0].mxu0
    %1592 = vdwg.mxu0
    %1593 = vmatprep.subr.bf16.mxu0 %v1340
    %1594 = vmatpush1.bf16.xpose.msra.mxu0 %v1339
    %1595 = vmatprep.subr.bf16.mxu0 %v1356
    %1596 = vmatpush1.bf16.xpose.msra.mxu0 %v1355
    %1597 = vmatprep.subr.bf16.mxu0 0
    %1598 = vmatpush1.bf16.xpose.msra.mxu0 0
    %1599 = vmatprep.subr.bf16.mxu0 0
    %1600 = vmatpush1.bf16.xpose.msra.mxu0 0
    %1601 = vmatprep.subr.bf16.mxu0 0
    %1602 = vmatpush1.bf16.xpose.msra.mxu0 0
    %1603 = vmatprep.subr.bf16.mxu0 0
    %1604 = vmatpush1.bf16.xpose.msra.mxu0 0
    %1605 = vmatprep.subr.bf16.mxu0 0
    %1606 = vmatpush1.bf16.xpose.msra.mxu0 0
    %1607 = vmatprep.subr.bf16.mxu0 0
    %1608 = vmatpush1.bf16.xpose.msra.mxu0 0
    %1609 = vmatprep.subr.bf16.mxu0 0
    %1610 = vmatpush1.bf16.xpose.msra.mxu0 0
    %1611 = vmatprep.subr.bf16.mxu0 0
    %1612 = vmatpush1.bf16.xpose.msra.mxu0 0
    %1613 = vmatprep.subr.bf16.mxu0 0
    %1614 = vmatpush1.bf16.xpose.msra.mxu0 0
    %1615 = vmatprep.subr.bf16.mxu0 0
    %1616 = vmatpush1.bf16.xpose.msra.mxu0 0
    %1617 = vmatprep.subr.bf16.mxu0 0
    %1618 = vmatpush1.bf16.xpose.msra.mxu0 0
    %1619 = vmatprep.subr.bf16.mxu0 0
    %1620 = vmatpush1.bf16.xpose.msra.mxu0 0
    %1621 = vmatprep.subr.bf16.mxu0 0
    %1622 = vmatpush1.bf16.xpose.msra.mxu0 0
    %1623 = vmatprep.subr.bf16.mxu0 0
    %1624 = vmatpush1.bf16.xpose.msra.mxu0 0
    %1625 = vmatprep.mubr.bf16.mxu0 %v1189
    %1626 = vmatmul.mubr.bf16.gmra.mrb[0].mxu0 %v1188
    %v1627 = vpop.f32.mrb[0].mxu0
    %v1628 = vadd.f32 %v1588, %v1627
    %v1629 = vpop.f32.mrb[0].mxu0
    %v1630 = vpop.f32.mrb[0].mxu0
    %v1631 = vpop.f32.mrb[0].mxu0
    %1632 = vdwg.mxu0
    %1633 = vmatprep.subr.bf16.mxu0 %v1342
    %1634 = vmatpush1.bf16.xpose.msra.mxu0 %v1341
    %1635 = vmatprep.subr.bf16.mxu0 %v1358
    %1636 = vmatpush1.bf16.xpose.msra.mxu0 %v1357
    %1637 = vmatprep.subr.bf16.mxu0 0
    %1638 = vmatpush1.bf16.xpose.msra.mxu0 0
    %1639 = vmatprep.subr.bf16.mxu0 0
    %1640 = vmatpush1.bf16.xpose.msra.mxu0 0
    %1641 = vmatprep.subr.bf16.mxu0 0
    %1642 = vmatpush1.bf16.xpose.msra.mxu0 0
    %1643 = vmatprep.subr.bf16.mxu0 0
    %1644 = vmatpush1.bf16.xpose.msra.mxu0 0
    %1645 = vmatprep.subr.bf16.mxu0 0
    %1646 = vmatpush1.bf16.xpose.msra.mxu0 0
    %1647 = vmatprep.subr.bf16.mxu0 0
    %1648 = vmatpush1.bf16.xpose.msra.mxu0 0
    %1649 = vmatprep.subr.bf16.mxu0 0
    %1650 = vmatpush1.bf16.xpose.msra.mxu0 0
    %1651 = vmatprep.subr.bf16.mxu0 0
    %1652 = vmatpush1.bf16.xpose.msra.mxu0 0
    %1653 = vmatprep.subr.bf16.mxu0 0
    %1654 = vmatpush1.bf16.xpose.msra.mxu0 0
    %1655 = vmatprep.subr.bf16.mxu0 0
    %1656 = vmatpush1.bf16.xpose.msra.mxu0 0
    %1657 = vmatprep.subr.bf16.mxu0 0
    %1658 = vmatpush1.bf16.xpose.msra.mxu0 0
    %1659 = vmatprep.subr.bf16.mxu0 0
    %1660 = vmatpush1.bf16.xpose.msra.mxu0 0
    %1661 = vmatprep.subr.bf16.mxu0 0
    %1662 = vmatpush1.bf16.xpose.msra.mxu0 0
    %1663 = vmatprep.subr.bf16.mxu0 0
    %1664 = vmatpush1.bf16.xpose.msra.mxu0 0
    %1665 = vmatprep.mubr.bf16.mxu0 %v1191
    %1666 = vmatmul.mubr.bf16.gmra.mrb[0].mxu0 %v1190
    %v1667 = vpop.f32.mrb[0].mxu0
    %v1668 = vadd.f32 %v1628, %v1667
    %v1669 = vpop.f32.mrb[0].mxu0
    %v1670 = vpop.f32.mrb[0].mxu0
    %v1671 = vpop.f32.mrb[0].mxu0
    %1672 = vdwg.mxu0
    %1673 = vmatprep.subr.bf16.mxu0 %v1344
    %1674 = vmatpush1.bf16.xpose.msra.mxu0 %v1343
    %1675 = vmatprep.subr.bf16.mxu0 %v1360
    %1676 = vmatpush1.bf16.xpose.msra.mxu0 %v1359
    %1677 = vmatprep.subr.bf16.mxu0 0
    %1678 = vmatpush1.bf16.xpose.msra.mxu0 0
    %1679 = vmatprep.subr.bf16.mxu0 0
    %1680 = vmatpush1.bf16.xpose.msra.mxu0 0
    %1681 = vmatprep.subr.bf16.mxu0 0
    %1682 = vmatpush1.bf16.xpose.msra.mxu0 0
    %1683 = vmatprep.subr.bf16.mxu0 0
    %1684 = vmatpush1.bf16.xpose.msra.mxu0 0
    %1685 = vmatprep.subr.bf16.mxu0 0
    %1686 = vmatpush1.bf16.xpose.msra.mxu0 0
    %1687 = vmatprep.subr.bf16.mxu0 0
    %1688 = vmatpush1.bf16.xpose.msra.mxu0 0
    %1689 = vmatprep.subr.bf16.mxu0 0
    %1690 = vmatpush1.bf16.xpose.msra.mxu0 0
    %1691 = vmatprep.subr.bf16.mxu0 0
    %1692 = vmatpush1.bf16.xpose.msra.mxu0 0
    %1693 = vmatprep.subr.bf16.mxu0 0
    %1694 = vmatpush1.bf16.xpose.msra.mxu0 0
    %1695 = vmatprep.subr.bf16.mxu0 0
    %1696 = vmatpush1.bf16.xpose.msra.mxu0 0
    %1697 = vmatprep.subr.bf16.mxu0 0
    %1698 = vmatpush1.bf16.xpose.msra.mxu0 0
    %1699 = vmatprep.subr.bf16.mxu0 0
    %1700 = vmatpush1.bf16.xpose.msra.mxu0 0
    %1701 = vmatprep.subr.bf16.mxu0 0
    %1702 = vmatpush1.bf16.xpose.msra.mxu0 0
    %1703 = vmatprep.subr.bf16.mxu0 0
    %1704 = vmatpush1.bf16.xpose.msra.mxu0 0
    %1705 = vmatprep.mubr.bf16.mxu0 %v1193
    %1706 = vmatmul.mubr.bf16.gmra.mrb[0].mxu0 %v1192
    %v1707 = vpop.f32.mrb[0].mxu0
    %v1708 = vadd.f32 %v1668, %v1707
    %v1709 = vpop.f32.mrb[0].mxu0
    %v1710 = vpop.f32.mrb[0].mxu0
    %v1711 = vpop.f32.mrb[0].mxu0
    %1712 = vdwg.mxu0
    %v1713 = vadd.f32 %v553, %v1708
    %v1714 = vld [vmem:[#allocation17] sm:$0x1]
    %v1715 = vld [vmem:[#allocation19] sm:$0x1]
    %v1716 = vsel %vm199, %v1713, 0.0
    %1717 = vadd.xlane.f32.xlu0 %v1716
    %v1718 = vpop.xlane.xlu0 %1717
    %v1719 = vmul.f32 %v1718, %v529
    %v1720 = vsub.f32 %v1713, %v1719
    %v1721 = vmul.f32 %v1720, %v1720
    %v1722 = vsel %vm199, %v1721, 0.0
    %1723 = vadd.xlane.f32.xlu0 %v1722
    %v1724 = vpop.xlane.xlu0 %1723
    %v1725 = vmul.f32 %v1724, %v529
    %v1726 = vadd.f32 %v1725, 1e-05
    %v1727 = vrsqrt.pop %v1726
    %v1728 = vmul.f32 %v1720, %v1727
    %v1730 = vlaneseq
    %v1731 = vshrl.u32 %v1730, 7
    %v1732 = vsub.s32 0, %v1731
    %v1733 = vrot.slane %v1714, %v1732
    %v1735 = vmul.f32 %v1728, %v1733
    %v1737 = vlaneseq
    %v1738 = vshrl.u32 %v1737, 7
    %v1739 = vsub.s32 0, %v1738
    %v1740 = vrot.slane %v1715, %v1739
    %v1742 = vadd.f32 %v1735, %v1740
    %v1743 = vld [vmem:[%s13] sm:$0xff]
    %v1744 = vld [vmem:[%s13 + $0x8] sm:$0xff]
    %v1745 = vld [vmem:[%s13 + $0x10] sm:$0xff]
    %v1746 = vld [vmem:[%s13 + $0x18] sm:$0xff]
    %v1747 = vld [vmem:[%s14] sm:$0x1]
    %v1749 = vlaneseq
    %v1750 = vshrl.u32 %v1749, 7
    %v1751 = vsub.s32 0, %v1750
    %v1752 = vrot.slane %v1747, %v1751
    %v1755 = vsel %vm199, %v1742, 0
    %1757 = vmatprep.subr.mxu0 0.0
    %1758 = vmatpush1.msra.mxu0 %v1743
    %1759 = vmatprep.subr.mxu0 0.0
    %1760 = vmatpush1.msra.mxu0 %v1744
    %1761 = vmatprep.subr.mxu0 0.0
    %1762 = vmatpush1.msra.mxu0 %v1745
    %1763 = vmatprep.subr.mxu0 0.0
    %1764 = vmatpush1.msra.mxu0 %v1746
    %1765 = vmatprep.subr.mxu0 0.0
    %1766 = vmatpush1.msra.mxu0 0.0
    %1767 = vmatprep.subr.mxu0 0.0
    %1768 = vmatpush1.msra.mxu0 0.0
    %1769 = vmatprep.subr.mxu0 0.0
    %1770 = vmatpush1.msra.mxu0 0.0
    %1771 = vmatprep.subr.mxu0 0.0
    %1772 = vmatpush1.msra.mxu0 0.0
    %1773 = vmatprep.subr.mxu0 0.0
    %1774 = vmatpush1.msra.mxu0 0.0
    %1775 = vmatprep.subr.mxu0 0.0
    %1776 = vmatpush1.msra.mxu0 0.0
    %1777 = vmatprep.subr.mxu0 0.0
    %1778 = vmatpush1.msra.mxu0 0.0
    %1779 = vmatprep.subr.mxu0 0.0
    %1780 = vmatpush1.msra.mxu0 0.0
    %1781 = vmatprep.subr.mxu0 0.0
    %1782 = vmatpush1.msra.mxu0 0.0
    %1783 = vmatprep.subr.mxu0 0.0
    %1784 = vmatpush1.msra.mxu0 0.0
    %1785 = vmatprep.subr.mxu0 0.0
    %1786 = vmatpush1.msra.mxu0 0.0
    %1787 = vmatprep.subr.mxu0 0.0
    %1788 = vmatpush1.msra.mxu0 0.0
    %1789 = vmatprep.subr.mxu0 0.0
    %1790 = vmatpush1.msra.mxu0 0.0
    %1791 = vmatprep.subr.mxu0 0.0
    %1792 = vmatpush1.msra.mxu0 0.0
    %1793 = vmatprep.subr.mxu0 0.0
    %1794 = vmatpush1.msra.mxu0 0.0
    %1795 = vmatprep.subr.mxu0 0.0
    %1796 = vmatpush1.msra.mxu0 0.0
    %1797 = vmatprep.subr.mxu0 0.0
    %1798 = vmatpush1.msra.mxu0 0.0
    %1799 = vmatprep.subr.mxu0 0.0
    %1800 = vmatpush1.msra.mxu0 0.0
    %1801 = vmatprep.subr.mxu0 0.0
    %1802 = vmatpush1.msra.mxu0 0.0
    %1803 = vmatprep.subr.mxu0 0.0
    %1804 = vmatpush1.msra.mxu0 0.0
    %1805 = vmatprep.subr.mxu0 0.0
    %1806 = vmatpush1.msra.mxu0 0.0
    %1807 = vmatprep.subr.mxu0 0.0
    %1808 = vmatpush1.msra.mxu0 0.0
    %1809 = vmatprep.subr.mxu0 0.0
    %1810 = vmatpush1.msra.mxu0 0.0
    %1811 = vmatprep.subr.mxu0 0.0
    %1812 = vmatpush1.msra.mxu0 0.0
    %1813 = vmatprep.subr.mxu0 0.0
    %1814 = vmatpush1.msra.mxu0 0.0
    %1815 = vmatprep.subr.mxu0 0.0
    %1816 = vmatpush1.msra.mxu0 0.0
    %1817 = vmatprep.subr.mxu0 0.0
    %1818 = vmatpush1.msra.mxu0 0.0
    %1819 = vmatprep.subr.mxu0 0.0
    %1820 = vmatpush1.msra.mxu0 0.0
    %1821 = vmatprep.mubr.f32.mxu0 0.0
    %1822 = vmatmul.mubr.f32.gmra.mrb[0].mxu0 %v1755
    %v1823 = vpop.f32.mrb[0].mxu0
    %v1824 = vadd.f32 %v1752, %v1823
    %v1825 = vpop.f32.mrb[0].mxu0
    %1826 = vdwg.mxu0
    %1827 = vst [vmem:[#allocation20] sm:$0xff] %v1824
    // Predicated region
    $region106: #{tpu_custom_call.1} parent=1 // pred_check
      _
    $region107: #{tpu_custom_call.1} parent=1 // pred_check_branch
      %1829 = sbr.rel (0) target = $region109
    $region108: #{tpu_custom_call.1} parent=1 // pred_region
      %s1831 = ssub.s32 128, 128
      %1832 = vsyncadd [#allocation4], %s1831
      %s1834 = sshll.u32 [#allocation20], 4
      %s1835 = int_to_ptr.vmem [resolvable:$true] %s1834
      %1837 = dma.vmem_to_hbm [thread:$0]  %s1835, 128, %s15, [#allocation4]
    $region109: #{tpu_custom_call.1} parent=1 // pred_fallthru
      _
    // Predicated region
    $region110: #{tpu_custom_call.1} parent=1 // pred_check
      _
    $region111: #{tpu_custom_call.1} parent=1 // pred_check_branch
      %1839 = sbr.rel (0) target = $region113
    $region112: #{tpu_custom_call.1} parent=1 // pred_region
      %1840 = dma.done [#allocation4], 128
    $region113: #{tpu_custom_call.1} parent=1 // pred_fallthru
      _
    %1841 = vsyncpa [#allocation3], 1
    %1842 = vsyncpa [#allocation6], 1
    %1843 = vsyncpa [#allocation9], 1
    %1844 = vsyncpa [#allocation12], 1
    %1845 = vsyncpa [#allocation15], 1
    %1846 = vsyncpa [#allocation18], 1
    %1847 = vsyncpa [#allocation4], 1

</llo_original>
